<compile_context>
chip_gen: v5e
topology: v5e:2x2
jax: 0.10.0
libtpu: 0.0.40
codegen_flags: <defaults>
</compile_context>

<pallas_src>
import functools
import math

import jax
import jax.numpy as jnp
import numpy as np
from jax import lax
from jax.experimental import pallas as pl
from jax.experimental.pallas import tpu as pltpu

_GN_GROUPS = 32
_GN_EPS = 1e-6


@functools.lru_cache(maxsize=None)
def _vmem_limit_bytes():
    """~75% of physical VMEM (96 MiB on v5e/v6e, 48 MiB on v7x), capped at 100 MiB."""
    cap = 128 * 1024 * 1024
    try:
        info = pltpu.get_tpu_info()
        cap = int(getattr(info, "vmem_capacity_bytes", cap))
    except Exception:
        pass
    return max(32 * 1024 * 1024, min(cap * 3 // 4, 100 * 1024 * 1024))


def _pick_tile(n, cap):
    """Largest divisor of n that is a multiple of 16 (bf16 sublane packing) and <= cap;
    fall back to multiples of 8, then to n itself."""
    for step in (16, 8):
        best = None
        t = step
        while t <= min(cap, n):
            if n % t == 0:
                best = t
            t += step
        if best is not None:
            return best
    return n


# ---------------------------------------------------------------------------
# Pass A: fused GroupNorm (stats + apply) + QKV' projection.  grid = (B,).
#   x is VMEM-resident per batch; per-channel sums are pooled into groups via tiny
#   (C,G)/(G,C) matmuls; the projection is ONE (N,C)@(C,3C) bf16 matmul.
#   q is pre-scaled by 1/sqrt(C) and v' already carries the OUT projection (both folds
#   are done host-side in f32).
# ---------------------------------------------------------------------------
def gn_qkv_kernel(x_ref, gamma_ref, beta_ref, pool_ref, expand_ref,
                  wqkv_ref, bqkv_ref, q_ref, k_ref, v_ref, *, inv_n, c):
    x = x_ref[0].astype(jnp.float32)                                   # (N, C)

    # --- GroupNorm statistics (per-channel sums -> group pooling) ---
    mean_c = jnp.sum(x, axis=0, keepdims=True) * inv_n                 # (1, C)
    ex2_c = jnp.sum(x * x, axis=0, keepdims=True) * inv_n              # (1, C)
    mu_g = jnp.dot(mean_c, pool_ref[...], preferred_element_type=jnp.float32)   # (1, G)
    ex2_g = jnp.dot(ex2_c, pool_ref[...], preferred_element_type=jnp.float32)
    mu = jnp.dot(mu_g, expand_ref[...], preferred_element_type=jnp.float32)     # (1, C)
    ex2 = jnp.dot(ex2_g, expand_ref[...], preferred_element_type=jnp.float32)
    # TODO(synk): switch to centered / Welford accumulation if very-large-magnitude
    # activations ever make E[x^2]-mu^2 cancel badly; the clamp guards NaNs.
    var = jnp.maximum(ex2 - mu * mu, 0.0)
    scale = lax.rsqrt(var + _GN_EPS) * gamma_ref[...]
    shift = beta_ref[...] - mu * scale

    # --- GroupNorm apply + single fused QKV' matmul (bf16 operands, f32 accumulation) ---
    h = (x * scale + shift).astype(jnp.bfloat16)                       # (N, C)
    qkv = jnp.dot(h, wqkv_ref[...], preferred_element_type=jnp.float32) + bqkv_ref[...]
    q_ref[0] = qkv[:, :c].astype(jnp.bfloat16)          # already scaled by 1/sqrt(C)
    k_ref[0] = qkv[:, c:2 * c].astype(jnp.bfloat16)
    v_ref[0] = qkv[:, 2 * c:].astype(jnp.bfloat16)      # V' = V @ WoT  (OUT proj folded)


# ---------------------------------------------------------------------------
# Pass B: flash attention with per-batch VMEM-resident K/V' + residual.
#   grid = (B, N // TQ), both axes "parallel".  Online softmax over key tiles with an
#   in-kernel fori_loop; the out-proj is already folded into V', so the epilogue is
#   one reciprocal + multiply + residual add.
# ---------------------------------------------------------------------------
def flash_attn_kernel(q_ref, k_ref, v_ref, x_ref, bo_ref, o_ref,
                      m_sc, l_sc, acc_sc, *, tk, n_k):
    m_sc[...] = jnp.full(m_sc.shape, -jnp.inf, jnp.float32)
    l_sc[...] = jnp.zeros(l_sc.shape, jnp.float32)
    acc_sc[...] = jnp.zeros(acc_sc.shape, jnp.float32)

    q = q_ref[0]                                       # (TQ, C) bf16, pre-scaled

    def body(t, carry):
        start = pl.multiple_of(t * tk, tk)
        k = k_ref[0, pl.ds(start, tk), :]              # (TK, C) bf16, batch-resident
        v = v_ref[0, pl.ds(start, tk), :]              # (TK, C) bf16, batch-resident
        # scores: contract over channels; key positions stay on the lane axis
        s = lax.dot_general(q, k, (((1,), (1,)), ((), ())),
                            preferred_element_type=jnp.float32)        # (TQ, TK) f32
        m_prev = m_sc[...]
        m_new = jnp.maximum(m_prev, jnp.max(s, axis=-1, keepdims=True))
        alpha = jnp.exp(m_prev - m_new)
        p = jnp.exp(s - m_new)                         # unnormalized probs (f32)
        l_sc[...] = alpha * l_sc[...] + jnp.sum(p, axis=-1, keepdims=True)
        acc_sc[...] = alpha * acc_sc[...] + jnp.dot(
            p.astype(jnp.bfloat16), v, preferred_element_type=jnp.float32)
        m_sc[...] = m_new
        return carry

    lax.fori_loop(0, n_k, body, 0)

    # deferred softmax normalization; OUT projection already folded into V'
    out = acc_sc[...] * pl.reciprocal(l_sc[...], approx=False) + bo_ref[...]
    o_ref[0] = (x_ref[0].astype(jnp.float32) + out).astype(o_ref.dtype)


# ---------------------------------------------------------------------------
# Wrapper: NCHW <-> (B, N, C) glue, host-side weight folding, and the two pallas_calls.
# ---------------------------------------------------------------------------
def attn_block(x_nchw, params, *, q_tile=None, k_tile=None):
    B, C, H, W = x_nchw.shape
    G = _GN_GROUPS
    assert C % G == 0, "GroupNorm(32) requires channels divisible by 32"
    N = H * W
    TQ = q_tile if q_tile is not None else _pick_tile(N, 256)
    TK = k_tile if k_tile is not None else _pick_tile(N, 512)
    assert N % TQ == 0 and N % TK == 0 and TQ % 8 == 0 and TK % 8 == 0
    n_q = N // TQ
    n_k = N // TK
    vmem_limit = _vmem_limit_bytes()
    q_scale = 1.0 / math.sqrt(C)
    f32 = jnp.float32

    # TODO(synk): carry activations NHWC through the surrounding UNet so these two
    # full-tensor transposes disappear from the per-block wrapper.
    x = jnp.transpose(x_nchw, (0, 2, 3, 1)).reshape(B, N, C)

    # host-side constants: (C,G) averages channels into groups, (G,C) broadcasts back
    gs = C // G
    gid = np.arange(C) // gs
    pool = jnp.asarray((gid[:, None] == np.arange(G)[None, :]).astype(np.float32) / gs)  # (C, G)
    expand = jnp.asarray((np.arange(G)[:, None] == gid[None, :]).astype(np.float32))     # (G, C)

    gamma = params["gn_weight"].reshape(1, C).astype(f32)
    beta = params["gn_bias"].reshape(1, C).astype(f32)

    # Weight folding (all products in f32, single cast to bf16):
    #   * 1/sqrt(C) folded into Wq / bq
    #   * OUT projection folded into V:  WvT' = WvT @ WoT,  bv' = bv @ WoT
    wo_t = params["wout"].T.astype(f32)
    wq_t = params["wq"].T.astype(f32) * q_scale
    wk_t = params["wk"].T.astype(f32)
    wv_t = params["wv"].T.astype(f32) @ wo_t
    w_qkv = jnp.concatenate([wq_t, wk_t, wv_t], axis=1).astype(jnp.bfloat16)   # (C, 3C)
    b_qkv = jnp.concatenate([params["bq"].astype(f32) * q_scale,
                             params["bk"].astype(f32),
                             params["bv"].astype(f32) @ wo_t]).reshape(1, 3 * C).astype(f32)
    bo = params["bout"].reshape(1, C).astype(f32)

    # ---- pass A: fused GroupNorm + QKV' projection (per-batch resident x) ----
    # TODO(synk): for stages where the per-batch (N, C) activation no longer fits the VMEM
    # budget, fall back to a streamed two-pass (stats / apply) variant.
    q, k, v = pl.pallas_call(
        functools.partial(gn_qkv_kernel, inv_n=1.0 / N, c=C),
        out_shape=(jax.ShapeDtypeStruct((B, N, C), jnp.bfloat16),) * 3,
        grid=(B,),
        in_specs=[pl.BlockSpec((1, N, C), lambda b: (b, 0, 0)),
                  pl.BlockSpec((1, C), lambda b: (0, 0)),
                  pl.BlockSpec((1, C), lambda b: (0, 0)),
                  pl.BlockSpec((C, G), lambda b: (0, 0)),
                  pl.BlockSpec((G, C), lambda b: (0, 0)),
                  pl.BlockSpec((C, 3 * C), lambda b: (0, 0)),
                  pl.BlockSpec((1, 3 * C), lambda b: (0, 0))],
        out_specs=(pl.BlockSpec((1, N, C), lambda b: (b, 0, 0)),) * 3,
        compiler_params=pltpu.CompilerParams(
            dimension_semantics=("parallel",),
            vmem_limit_bytes=vmem_limit),
        cost_estimate=pl.CostEstimate(
            flops=int(6 * B * N * C * C + 8 * B * N * C),
            transcendentals=int(B * C),
            bytes_accessed=int(4 * B * N * C + 6 * B * N * C + 6 * C * C + 2 * B * N * C)),
    )(x, gamma, beta, pool, expand, w_qkv, b_qkv)

    # ---- pass B: flash attention (resident K/V', online softmax) + residual ----
    out = pl.pallas_call(
        functools.partial(flash_attn_kernel, tk=TK, n_k=n_k),
        out_shape=jax.ShapeDtypeStruct((B, N, C), x.dtype),
        grid=(B, n_q),
        in_specs=[pl.BlockSpec((1, TQ, C), lambda b, i: (b, i, 0)),   # q tile
                  pl.BlockSpec((1, N, C), lambda b, i: (b, 0, 0)),    # K  (per-batch resident)
                  pl.BlockSpec((1, N, C), lambda b, i: (b, 0, 0)),    # V' (per-batch resident)
                  pl.BlockSpec((1, TQ, C), lambda b, i: (b, i, 0)),   # x tile (residual)
                  pl.BlockSpec((1, C), lambda b, i: (0, 0))],         # bo
        out_specs=pl.BlockSpec((1, TQ, C), lambda b, i: (b, i, 0)),
        scratch_shapes=[pltpu.VMEM((TQ, 1), jnp.float32),    # m (running max)
                        pltpu.VMEM((TQ, 1), jnp.float32),    # l (running denom)
                        pltpu.VMEM((TQ, C), jnp.float32)],   # acc
        compiler_params=pltpu.CompilerParams(
            dimension_semantics=("parallel", "parallel"),
            vmem_limit_bytes=vmem_limit),
        cost_estimate=pl.CostEstimate(
            flops=int(4 * B * N * N * C),
            transcendentals=int(2 * B * N * N),
            bytes_accessed=int(B * N * C * (2 + 4 + 4 + 4))),
    )(q, k, v, x, bo)

    return jnp.transpose(out.reshape(B, H, W, C), (0, 3, 1, 2))


# ---------------------------------------------------------------------------
# Deterministic parameter init (mirrors the PyTorch __init__ shapes / scales).
# ---------------------------------------------------------------------------
def xavier_uniform(key, shape, gain):
    fan_out, fan_in = shape
    bound = gain * math.sqrt(6.0 / (fan_in + fan_out))
    return jax.random.uniform(key, shape, jnp.float32, -bound, bound)


def init_params(key, C):
    ks = jax.random.split(key, 4)
    g_qkv = math.sqrt(1.0 / 2.0)
    g_out = math.sqrt(1e-10 / 2.0)
    zeros_c = jnp.zeros((C,), jnp.float32)
    return dict(
        gn_weight=jnp.ones((C,), jnp.float32),
        gn_bias=zeros_c,
        wq=xavier_uniform(ks[0], (C, C), g_qkv), bq=zeros_c,
        wk=xavier_uniform(ks[1], (C, C), g_qkv), bk=zeros_c,
        wv=xavier_uniform(ks[2], (C, C), g_qkv), bv=zeros_c,
        wout=xavier_uniform(ks[3], (C, C), g_out), bout=zeros_c,
    )


# ---------------------------------------------------------------------------
# Pure-JAX reference (mirrors the PyTorch forward exactly) for validation.
# ---------------------------------------------------------------------------
def attn_block_reference(x, params):
    B, C, H, W = x.shape
    G = _GN_GROUPS
    xg = x.reshape(B, G, C // G, H, W)
    mu = xg.mean(axis=(2, 3, 4), keepdims=True)
    var = ((xg - mu) ** 2).mean(axis=(2, 3, 4), keepdims=True)
    h = ((xg - mu) / jnp.sqrt(var + _GN_EPS)).reshape(B, C, H, W)
    h = h * params["gn_weight"].reshape(1, C, 1, 1) + params["gn_bias"].reshape(1, C, 1, 1)

    hf = h.reshape(B, C, H * W)

    def nin(w, b, t):
        return jnp.einsum("oc,bcn->bon", w, t) + b[None, :, None]

    q = nin(params["wq"], params["bq"], hf)
    k = nin(params["wk"], params["bk"], hf)
    v = nin(params["wv"], params["bv"], hf)

    w = jnp.einsum("bcp,bck->bpk", q, k) * (1.0 / math.sqrt(C))   # (B, N, N)
    w = jax.nn.softmax(w, axis=-1)
    ho = jnp.einsum("bpk,bck->bcp", w, v)                          # (B, C, N)
    out = nin(params["wout"], params["bout"], ho)
    return x + out.reshape(B, C, H, W)


if __name__ == "__main__":
    key = jax.random.PRNGKey(0)
    kx, kp, ko = jax.random.split(key, 3)

    B, C, H, W = 2, 64, 16, 16       # C must be a multiple of 32 (GroupNorm groups)
    x = jax.random.normal(kx, (B, C, H, W), dtype=jnp.float32)
    params = init_params(kp, C)

    # q_tile=k_tile=64 -> N=256 splits into 4 query x 4 key tiles, exercising the
    # online-softmax loop and the query-tile grid axis.
    fn = jax.jit(functools.partial(attn_block, q_tile=64, k_tile=64))

    # 1) faithful init (OUT init_scale = 1e-10, as in the PyTorch module): full-output check
    y = jax.block_until_ready(fn(x, params))
    assert y.shape == (B, C, H, W)
    y_ref = attn_block_reference(x, params)
    err = float(jnp.max(jnp.abs(y - y_ref)))
    assert err < 1e-3, f"mismatch vs reference (faithful init): {err}"

    # 2) attention-path check with a unit-scale OUT projection.  With the faithful 1e-10
    #    scale the attention contribution (~1e-7) is below the f32 rounding of the residual
    #    add, so backing it out of y - x is meaningless; a unit-scale OUT makes the delta
    #    O(1e-2) and the comparison exercises GN + QKV + softmax + PV + OUT end to end.
    params_u = dict(params)
    params_u["wout"] = xavier_uniform(ko, (C, C), math.sqrt(1.0 / 2.0))
    y_u = jax.block_until_ready(fn(x, params_u))
    y_u_ref = attn_block_reference(x, params_u)
    delta_scale = float(jnp.max(jnp.abs(y_u_ref - x)))
    rel = float(jnp.max(jnp.abs(y_u - y_u_ref))) / (delta_scale + 1e-20)
    assert rel < 0.08, f"attention-path relative mismatch: {rel}"

    print("KERNEL_OK")
</pallas_src>

<mosaic_0001>
module attributes {stable_mosaic.version = 11 : i64} {
  func.func @flash_attn_kernel(%arg0: i32, %arg1: i32, %arg2: memref<1x64x64xbf16, #tpu.memory_space<vmem>>, %arg3: memref<1x256x64xbf16, #tpu.memory_space<vmem>>, %arg4: memref<1x256x64xbf16, #tpu.memory_space<vmem>>, %arg5: memref<1x64x64xf32, #tpu.memory_space<vmem>>, %arg6: memref<1x64xf32, #tpu.memory_space<vmem>>, %arg7: memref<1x64x64xf32, #tpu.memory_space<vmem>>, %arg8: memref<64x1xf32, #tpu.memory_space<vmem>>, %arg9: memref<64x1xf32, #tpu.memory_space<vmem>>, %arg10: memref<64x64xf32, #tpu.memory_space<vmem>>) attributes {dimension_semantics = [#tpu.dimension_semantics<parallel>, #tpu.dimension_semantics<parallel>], iteration_bounds = array<i64: 2, 4>, scalar_prefetch = 0 : i64, scratch_operands = 3 : i64, tpu.core_type = #tpu.core_type<tc>, window_params = [{transform_indices = @transform_0, window_bounds = array<i64: 1, 64, 64>}, {transform_indices = @transform_1, window_bounds = array<i64: 1, 256, 64>}, {transform_indices = @transform_2, window_bounds = array<i64: 1, 256, 64>}, {transform_indices = @transform_3, window_bounds = array<i64: 1, 64, 64>}, {pipeline_mode = #tpu.pipeline_mode<synchronous>, transform_indices = @transform_4, window_bounds = array<i64: 1, 64>}, {transform_indices = @transform_5, window_bounds = array<i64: 1, 64, 64>}]} {
    %cst = arith.constant 0xFF800000 : f32
    %0 = vector.broadcast %cst : f32 to vector<64x1xf32>
    %c0 = arith.constant 0 : index
    %c0_0 = arith.constant 0 : index
    %1 = vector.load %arg8[%c0, %c0_0] : memref<64x1xf32, #tpu.memory_space<vmem>>, vector<64x1xf32>
    tpu.vector_store %arg8[%c0, %c0_0], %0 {strides = array<i32>} : memref<64x1xf32, #tpu.memory_space<vmem>>, vector<64x1xf32>,
    %cst_1 = arith.constant 0.000000e+00 : f32
    %2 = vector.broadcast %cst_1 : f32 to vector<64x1xf32>
    %c0_2 = arith.constant 0 : index
    %c0_3 = arith.constant 0 : index
    %3 = vector.load %arg9[%c0_2, %c0_3] : memref<64x1xf32, #tpu.memory_space<vmem>>, vector<64x1xf32>
    tpu.vector_store %arg9[%c0_2, %c0_3], %2 {strides = array<i32>} : memref<64x1xf32, #tpu.memory_space<vmem>>, vector<64x1xf32>,
    %cst_4 = arith.constant 0.000000e+00 : f32
    %4 = vector.broadcast %cst_4 : f32 to vector<64x64xf32>
    %c0_5 = arith.constant 0 : index
    %c0_6 = arith.constant 0 : index
    %5 = vector.load %arg10[%c0_5, %c0_6] : memref<64x64xf32, #tpu.memory_space<vmem>>, vector<64x64xf32>
    tpu.vector_store %arg10[%c0_5, %c0_6], %4 {strides = array<i32>} : memref<64x64xf32, #tpu.memory_space<vmem>>, vector<64x64xf32>,
    %c0_7 = arith.constant 0 : index
    %c0_8 = arith.constant 0 : index
    %c0_9 = arith.constant 0 : index
    %6 = vector.load %arg2[%c0_7, %c0_8, %c0_9] : memref<1x64x64xbf16, #tpu.memory_space<vmem>>, vector<1x64x64xbf16>
    %7 = vector.shape_cast %6 : vector<1x64x64xbf16> to vector<64x64xbf16>
    %c0_i32 = arith.constant 0 : i32
    %c4_i32 = arith.constant 4 : i32
    %8 = arith.addi %c0_i32, %c4_i32 : i32
    %c1_i32 = arith.constant 1 : i32
    scf.for %arg11 = %c0_i32 to %8 step %c1_i32  : i32 {
      %c64_i32 = arith.constant 64 : i32
      %23 = arith.muli %arg11, %c64_i32 : i32
      %24 = tpu.assume_multiple %23, 64 : i32
      %c0_23 = arith.constant 0 : index
      %25 = arith.index_cast %24 : i32 to index
      %c0_24 = arith.constant 0 : index
      %26 = vector.load %arg3[%c0_23, %25, %c0_24] : memref<1x256x64xbf16, #tpu.memory_space<vmem>>, vector<1x64x64xbf16>
      %27 = vector.shape_cast %26 : vector<1x64x64xbf16> to vector<64x64xbf16>
      %c0_25 = arith.constant 0 : index
      %28 = arith.index_cast %24 : i32 to index
      %c0_26 = arith.constant 0 : index
      %29 = vector.load %arg4[%c0_25, %28, %c0_26] : memref<1x256x64xbf16, #tpu.memory_space<vmem>>, vector<1x64x64xbf16>
      %30 = vector.shape_cast %29 : vector<1x64x64xbf16> to vector<64x64xbf16>
      %cst_27 = arith.constant dense<0.000000e+00> : vector<64x64xf32>
      %31 = tpu.matmul %7, %27, %cst_27 {dimension_numbers = #tpu.dot_dimension_numbers<[1], [1], [0], [0], [0, 0, 1, 0], [], []>} : vector<64x64xbf16>, vector<64x64xbf16>, vector<64x64xf32> -> vector<64x64xf32>
      %c0_28 = arith.constant 0 : index
      %c0_29 = arith.constant 0 : index
      %32 = vector.load %arg8[%c0_28, %c0_29] : memref<64x1xf32, #tpu.memory_space<vmem>>, vector<64x1xf32>
      %cst_30 = arith.constant dense<0xFF800000> : vector<64xf32>
      %33 = vector.multi_reduction <maximumf>, %31, %cst_30 [1] : vector<64x64xf32> to vector<64xf32>
      %34 = vector.shape_cast %33 : vector<64xf32> to vector<64x1xf32>
      %35 = arith.maximumf %32, %34 : vector<64x1xf32>
      %36 = arith.subf %32, %35 : vector<64x1xf32>
      %37 = math.exp %36 : vector<64x1xf32>
      %38 = vector.broadcast %35 : vector<64x1xf32> to vector<64x64xf32>
      %39 = arith.subf %31, %38 : vector<64x64xf32>
      %40 = math.exp %39 : vector<64x64xf32>
      %c0_31 = arith.constant 0 : index
      %c0_32 = arith.constant 0 : index
      %41 = vector.load %arg9[%c0_31, %c0_32] : memref<64x1xf32, #tpu.memory_space<vmem>>, vector<64x1xf32>
      %42 = arith.mulf %37, %41 : vector<64x1xf32>
      %cst_33 = arith.constant dense<0.000000e+00> : vector<64xf32>
      %43 = vector.multi_reduction <add>, %40, %cst_33 [1] : vector<64x64xf32> to vector<64xf32>
      %44 = vector.shape_cast %43 : vector<64xf32> to vector<64x1xf32>
      %45 = arith.addf %42, %44 : vector<64x1xf32>
      %c0_34 = arith.constant 0 : index
      %c0_35 = arith.constant 0 : index
      %46 = vector.load %arg9[%c0_34, %c0_35] : memref<64x1xf32, #tpu.memory_space<vmem>>, vector<64x1xf32>
      tpu.vector_store %arg9[%c0_34, %c0_35], %45 {strides = array<i32>} : memref<64x1xf32, #tpu.memory_space<vmem>>, vector<64x1xf32>,
      %c0_36 = arith.constant 0 : index
      %c0_37 = arith.constant 0 : index
      %47 = vector.load %arg10[%c0_36, %c0_37] : memref<64x64xf32, #tpu.memory_space<vmem>>, vector<64x64xf32>
      %48 = vector.broadcast %37 : vector<64x1xf32> to vector<64x64xf32>
      %49 = arith.mulf %48, %47 : vector<64x64xf32>
      %50 = arith.truncf %40 : vector<64x64xf32> to vector<64x64xbf16>
      %cst_38 = arith.constant dense<0.000000e+00> : vector<64x64xf32>
      %51 = tpu.matmul %50, %30, %cst_38 {dimension_numbers = #tpu.dot_dimension_numbers<[1], [0], [0], [1], [0, 0, 1, 1], [], []>} : vector<64x64xbf16>, vector<64x64xbf16>, vector<64x64xf32> -> vector<64x64xf32>
      %52 = arith.addf %49, %51 : vector<64x64xf32>
      %c0_39 = arith.constant 0 : index
      %c0_40 = arith.constant 0 : index
      %53 = vector.load %arg10[%c0_39, %c0_40] : memref<64x64xf32, #tpu.memory_space<vmem>>, vector<64x64xf32>
      tpu.vector_store %arg10[%c0_39, %c0_40], %52 {strides = array<i32>} : memref<64x64xf32, #tpu.memory_space<vmem>>, vector<64x64xf32>,
      %c0_41 = arith.constant 0 : index
      %c0_42 = arith.constant 0 : index
      %54 = vector.load %arg8[%c0_41, %c0_42] : memref<64x1xf32, #tpu.memory_space<vmem>>, vector<64x1xf32>
      tpu.vector_store %arg8[%c0_41, %c0_42], %35 {strides = array<i32>} : memref<64x1xf32, #tpu.memory_space<vmem>>, vector<64x1xf32>,
    }
    %c4_i32_10 = arith.constant 4 : i32
    %c0_11 = arith.constant 0 : index
    %c0_12 = arith.constant 0 : index
    %9 = vector.load %arg10[%c0_11, %c0_12] : memref<64x64xf32, #tpu.memory_space<vmem>>, vector<64x64xf32>
    %c0_13 = arith.constant 0 : index
    %c0_14 = arith.constant 0 : index
    %10 = vector.load %arg9[%c0_13, %c0_14] : memref<64x1xf32, #tpu.memory_space<vmem>>, vector<64x1xf32>
    %11 = tpu.reciprocal %10 : vector<64x1xf32> -> vector<64x1xf32>
    %12 = vector.broadcast %11 : vector<64x1xf32> to vector<64x64xf32>
    %13 = arith.mulf %9, %12 : vector<64x64xf32>
    %c0_15 = arith.constant 0 : index
    %c0_16 = arith.constant 0 : index
    %14 = vector.load %arg6[%c0_15, %c0_16] : memref<1x64xf32, #tpu.memory_space<vmem>>, vector<1x64xf32>
    %15 = vector.broadcast %14 : vector<1x64xf32> to vector<64x64xf32>
    %16 = arith.addf %13, %15 : vector<64x64xf32>
    %c0_17 = arith.constant 0 : index
    %c0_18 = arith.constant 0 : index
    %c0_19 = arith.constant 0 : index
    %17 = vector.load %arg5[%c0_17, %c0_18, %c0_19] : memref<1x64x64xf32, #tpu.memory_space<vmem>>, vector<1x64x64xf32>
    %18 = vector.shape_cast %17 : vector<1x64x64xf32> to vector<64x64xf32>
    %19 = arith.addf %18, %16 : vector<64x64xf32>
    %c0_20 = arith.constant 0 : index
    %c0_21 = arith.constant 0 : index
    %c0_22 = arith.constant 0 : index
    %20 = vector.load %arg7[%c0_20, %c0_21, %c0_22] : memref<1x64x64xf32, #tpu.memory_space<vmem>>, vector<1x64x64xf32>
    %21 = vector.shape_cast %20 : vector<1x64x64xf32> to vector<64x64xf32>
    %22 = vector.shape_cast %19 : vector<64x64xf32> to vector<1x64x64xf32>
    tpu.vector_store %arg7[%c0_20, %c0_21, %c0_22], %22 {strides = array<i32>} : memref<1x64x64xf32, #tpu.memory_space<vmem>>, vector<1x64x64xf32>,
    return
  }
  func.func @transform_0(%arg0: i32, %arg1: i32) -> (i32, i32, i32) {
    %c0_i32 = arith.constant 0 : i32
    %c0_i32_0 = arith.constant 0 : i32
    return %arg0, %arg1, %c0_i32 : i32, i32, i32
  }
  func.func @transform_1(%arg0: i32, %arg1: i32) -> (i32, i32, i32) {
    %c0_i32 = arith.constant 0 : i32
    %c0_i32_0 = arith.constant 0 : i32
    %c0_i32_1 = arith.constant 0 : i32
    return %arg0, %c0_i32, %c0_i32_0 : i32, i32, i32
  }
  func.func @transform_2(%arg0: i32, %arg1: i32) -> (i32, i32, i32) {
    %c0_i32 = arith.constant 0 : i32
    %c0_i32_0 = arith.constant 0 : i32
    %c0_i32_1 = arith.constant 0 : i32
    return %arg0, %c0_i32, %c0_i32_0 : i32, i32, i32
  }
  func.func @transform_3(%arg0: i32, %arg1: i32) -> (i32, i32, i32) {
    %c0_i32 = arith.constant 0 : i32
    %c0_i32_0 = arith.constant 0 : i32
    return %arg0, %arg1, %c0_i32 : i32, i32, i32
  }
  func.func @transform_4(%arg0: i32, %arg1: i32) -> (i32, i32) {
    %c0_i32 = arith.constant 0 : i32
    %c0_i32_0 = arith.constant 0 : i32
    %c0_i32_1 = arith.constant 0 : i32
    return %c0_i32, %c0_i32_0 : i32, i32
  }
  func.func @transform_5(%arg0: i32, %arg1: i32) -> (i32, i32, i32) {
    %c0_i32 = arith.constant 0 : i32
    %c0_i32_0 = arith.constant 0 : i32
    return %arg0, %arg1, %c0_i32 : i32, i32, i32
  }
}

module attributes {stable_mosaic.version = 11 : i64} {
  func.func @gn_qkv_kernel(%arg0: i32, %arg1: memref<1x256x64xf32, #tpu.memory_space<vmem>>, %arg2: memref<1x64xf32, #tpu.memory_space<vmem>>, %arg3: memref<1x64xf32, #tpu.memory_space<vmem>>, %arg4: memref<64x32xf32, #tpu.memory_space<vmem>>, %arg5: memref<32x64xf32, #tpu.memory_space<vmem>>, %arg6: memref<64x192xbf16, #tpu.memory_space<vmem>>, %arg7: memref<1x192xf32, #tpu.memory_space<vmem>>, %arg8: memref<1x256x64xbf16, #tpu.memory_space<vmem>>, %arg9: memref<1x256x64xbf16, #tpu.memory_space<vmem>>, %arg10: memref<1x256x64xbf16, #tpu.memory_space<vmem>>) attributes {dimension_semantics = [#tpu.dimension_semantics<parallel>], iteration_bounds = array<i64: 2>, scalar_prefetch = 0 : i64, scratch_operands = 0 : i64, tpu.core_type = #tpu.core_type<tc>, window_params = [{transform_indices = @transform_0, window_bounds = array<i64: 1, 256, 64>}, {pipeline_mode = #tpu.pipeline_mode<synchronous>, transform_indices = @transform_1, window_bounds = array<i64: 1, 64>}, {pipeline_mode = #tpu.pipeline_mode<synchronous>, transform_indices = @transform_2, window_bounds = array<i64: 1, 64>}, {pipeline_mode = #tpu.pipeline_mode<synchronous>, transform_indices = @transform_3, window_bounds = array<i64: 64, 32>}, {pipeline_mode = #tpu.pipeline_mode<synchronous>, transform_indices = @transform_4, window_bounds = array<i64: 32, 64>}, {pipeline_mode = #tpu.pipeline_mode<synchronous>, transform_indices = @transform_5, window_bounds = array<i64: 64, 192>}, {pipeline_mode = #tpu.pipeline_mode<synchronous>, transform_indices = @transform_6, window_bounds = array<i64: 1, 192>}, {transform_indices = @transform_7, window_bounds = array<i64: 1, 256, 64>}, {transform_indices = @transform_8, window_bounds = array<i64: 1, 256, 64>}, {transform_indices = @transform_9, window_bounds = array<i64: 1, 256, 64>}]} {
    %c0 = arith.constant 0 : index
    %c0_0 = arith.constant 0 : index
    %c0_1 = arith.constant 0 : index
    %0 = vector.load %arg1[%c0, %c0_0, %c0_1] : memref<1x256x64xf32, #tpu.memory_space<vmem>>, vector<1x256x64xf32>
    %1 = vector.shape_cast %0 : vector<1x256x64xf32> to vector<256x64xf32>
    %cst = arith.constant dense<0.000000e+00> : vector<64xf32>
    %2 = vector.multi_reduction <add>, %1, %cst [0] : vector<256x64xf32> to vector<64xf32>
    %3 = vector.shape_cast %2 : vector<64xf32> to vector<1x64xf32>
    %cst_2 = arith.constant 3.906250e-03 : f32
    %4 = vector.broadcast %cst_2 : f32 to vector<1x64xf32>
    %5 = arith.mulf %3, %4 : vector<1x64xf32>
    %6 = arith.mulf %1, %1 : vector<256x64xf32>
    %cst_3 = arith.constant dense<0.000000e+00> : vector<64xf32>
    %7 = vector.multi_reduction <add>, %6, %cst_3 [0] : vector<256x64xf32> to vector<64xf32>
    %8 = vector.shape_cast %7 : vector<64xf32> to vector<1x64xf32>
    %cst_4 = arith.constant 3.906250e-03 : f32
    %9 = vector.broadcast %cst_4 : f32 to vector<1x64xf32>
    %10 = arith.mulf %8, %9 : vector<1x64xf32>
    %c0_5 = arith.constant 0 : index
    %c0_6 = arith.constant 0 : index
    %11 = vector.load %arg4[%c0_5, %c0_6] : memref<64x32xf32, #tpu.memory_space<vmem>>, vector<64x32xf32>
    %cst_7 = arith.constant dense<0.000000e+00> : vector<1x32xf32>
    %12 = tpu.matmul %5, %11, %cst_7 {dimension_numbers = #tpu.dot_dimension_numbers<[1], [0], [0], [1], [0, 0, 1, 1], [], []>} : vector<1x64xf32>, vector<64x32xf32>, vector<1x32xf32> -> vector<1x32xf32>
    %c0_8 = arith.constant 0 : index
    %c0_9 = arith.constant 0 : index
    %13 = vector.load %arg4[%c0_8, %c0_9] : memref<64x32xf32, #tpu.memory_space<vmem>>, vector<64x32xf32>
    %cst_10 = arith.constant dense<0.000000e+00> : vector<1x32xf32>
    %14 = tpu.matmul %10, %13, %cst_10 {dimension_numbers = #tpu.dot_dimension_numbers<[1], [0], [0], [1], [0, 0, 1, 1], [], []>} : vector<1x64xf32>, vector<64x32xf32>, vector<1x32xf32> -> vector<1x32xf32>
    %c0_11 = arith.constant 0 : index
    %c0_12 = arith.constant 0 : index
    %15 = vector.load %arg5[%c0_11, %c0_12] : memref<32x64xf32, #tpu.memory_space<vmem>>, vector<32x64xf32>
    %cst_13 = arith.constant dense<0.000000e+00> : vector<1x64xf32>
    %16 = tpu.matmul %12, %15, %cst_13 {dimension_numbers = #tpu.dot_dimension_numbers<[1], [0], [0], [1], [0, 0, 1, 1], [], []>} : vector<1x32xf32>, vector<32x64xf32>, vector<1x64xf32> -> vector<1x64xf32>
    %c0_14 = arith.constant 0 : index
    %c0_15 = arith.constant 0 : index
    %17 = vector.load %arg5[%c0_14, %c0_15] : memref<32x64xf32, #tpu.memory_space<vmem>>, vector<32x64xf32>
    %cst_16 = arith.constant dense<0.000000e+00> : vector<1x64xf32>
    %18 = tpu.matmul %14, %17, %cst_16 {dimension_numbers = #tpu.dot_dimension_numbers<[1], [0], [0], [1], [0, 0, 1, 1], [], []>} : vector<1x32xf32>, vector<32x64xf32>, vector<1x64xf32> -> vector<1x64xf32>
    %19 = arith.mulf %16, %16 : vector<1x64xf32>
    %20 = arith.subf %18, %19 : vector<1x64xf32>
    %cst_17 = arith.constant 0.000000e+00 : f32
    %21 = vector.broadcast %cst_17 : f32 to vector<1x64xf32>
    %22 = arith.maximumf %20, %21 : vector<1x64xf32>
    %cst_18 = arith.constant 9.99999997E-7 : f32
    %23 = vector.broadcast %cst_18 : f32 to vector<1x64xf32>
    %24 = arith.addf %22, %23 : vector<1x64xf32>
    %25 = math.rsqrt %24 : vector<1x64xf32>
    %c0_19 = arith.constant 0 : index
    %c0_20 = arith.constant 0 : index
    %26 = vector.load %arg2[%c0_19, %c0_20] : memref<1x64xf32, #tpu.memory_space<vmem>>, vector<1x64xf32>
    %27 = arith.mulf %25, %26 : vector<1x64xf32>
    %c0_21 = arith.constant 0 : index
    %c0_22 = arith.constant 0 : index
    %28 = vector.load %arg3[%c0_21, %c0_22] : memref<1x64xf32, #tpu.memory_space<vmem>>, vector<1x64xf32>
    %29 = arith.mulf %16, %27 : vector<1x64xf32>
    %30 = arith.subf %28, %29 : vector<1x64xf32>
    %31 = vector.broadcast %27 : vector<1x64xf32> to vector<256x64xf32>
    %32 = arith.mulf %1, %31 : vector<256x64xf32>
    %33 = vector.broadcast %30 : vector<1x64xf32> to vector<256x64xf32>
    %34 = arith.addf %32, %33 : vector<256x64xf32>
    %35 = arith.truncf %34 : vector<256x64xf32> to vector<256x64xbf16>
    %c0_23 = arith.constant 0 : index
    %c0_24 = arith.constant 0 : index
    %36 = vector.load %arg6[%c0_23, %c0_24] : memref<64x192xbf16, #tpu.memory_space<vmem>>, vector<64x192xbf16>
    %cst_25 = arith.constant dense<0.000000e+00> : vector<256x192xf32>
    %37 = tpu.matmul %35, %36, %cst_25 {dimension_numbers = #tpu.dot_dimension_numbers<[1], [0], [0], [1], [0, 0, 1, 1], [], []>} : vector<256x64xbf16>, vector<64x192xbf16>, vector<256x192xf32> -> vector<256x192xf32>
    %c0_26 = arith.constant 0 : index
    %c0_27 = arith.constant 0 : index
    %38 = vector.load %arg7[%c0_26, %c0_27] : memref<1x192xf32, #tpu.memory_space<vmem>>, vector<1x192xf32>
    %39 = vector.broadcast %38 : vector<1x192xf32> to vector<256x192xf32>
    %40 = arith.addf %37, %39 : vector<256x192xf32>
    %41 = vector.extract_strided_slice %40 {offsets = [0, 0], sizes = [256, 64], strides = [1, 1]} : vector<256x192xf32> to vector<256x64xf32>
    %42 = arith.truncf %41 : vector<256x64xf32> to vector<256x64xbf16>
    %c0_28 = arith.constant 0 : index
    %c0_29 = arith.constant 0 : index
    %c0_30 = arith.constant 0 : index
    %43 = vector.load %arg8[%c0_28, %c0_29, %c0_30] : memref<1x256x64xbf16, #tpu.memory_space<vmem>>, vector<1x256x64xbf16>
    %44 = vector.shape_cast %43 : vector<1x256x64xbf16> to vector<256x64xbf16>
    %45 = vector.shape_cast %42 : vector<256x64xbf16> to vector<1x256x64xbf16>
    tpu.vector_store %arg8[%c0_28, %c0_29, %c0_30], %45 {strides = array<i32>} : memref<1x256x64xbf16, #tpu.memory_space<vmem>>, vector<1x256x64xbf16>,
    %46 = vector.extract_strided_slice %40 {offsets = [0, 64], sizes = [256, 64], strides = [1, 1]} : vector<256x192xf32> to vector<256x64xf32>
    %47 = arith.truncf %46 : vector<256x64xf32> to vector<256x64xbf16>
    %c0_31 = arith.constant 0 : index
    %c0_32 = arith.constant 0 : index
    %c0_33 = arith.constant 0 : index
    %48 = vector.load %arg9[%c0_31, %c0_32, %c0_33] : memref<1x256x64xbf16, #tpu.memory_space<vmem>>, vector<1x256x64xbf16>
    %49 = vector.shape_cast %48 : vector<1x256x64xbf16> to vector<256x64xbf16>
    %50 = vector.shape_cast %47 : vector<256x64xbf16> to vector<1x256x64xbf16>
    tpu.vector_store %arg9[%c0_31, %c0_32, %c0_33], %50 {strides = array<i32>} : memref<1x256x64xbf16, #tpu.memory_space<vmem>>, vector<1x256x64xbf16>,
    %51 = vector.extract_strided_slice %40 {offsets = [0, 128], sizes = [256, 64], strides = [1, 1]} : vector<256x192xf32> to vector<256x64xf32>
    %52 = arith.truncf %51 : vector<256x64xf32> to vector<256x64xbf16>
    %c0_34 = arith.constant 0 : index
    %c0_35 = arith.constant 0 : index
    %c0_36 = arith.constant 0 : index
    %53 = vector.load %arg10[%c0_34, %c0_35, %c0_36] : memref<1x256x64xbf16, #tpu.memory_space<vmem>>, vector<1x256x64xbf16>
    %54 = vector.shape_cast %53 : vector<1x256x64xbf16> to vector<256x64xbf16>
    %55 = vector.shape_cast %52 : vector<256x64xbf16> to vector<1x256x64xbf16>
    tpu.vector_store %arg10[%c0_34, %c0_35, %c0_36], %55 {strides = array<i32>} : memref<1x256x64xbf16, #tpu.memory_space<vmem>>, vector<1x256x64xbf16>,
    return
  }
  func.func @transform_0(%arg0: i32) -> (i32, i32, i32) {
    %c0_i32 = arith.constant 0 : i32
    %c0_i32_0 = arith.constant 0 : i32
    %c0_i32_1 = arith.constant 0 : i32
    return %arg0, %c0_i32, %c0_i32_0 : i32, i32, i32
  }
  func.func @transform_1(%arg0: i32) -> (i32, i32) {
    %c0_i32 = arith.constant 0 : i32
    %c0_i32_0 = arith.constant 0 : i32
    %c0_i32_1 = arith.constant 0 : i32
    return %c0_i32, %c0_i32_0 : i32, i32
  }
  func.func @transform_2(%arg0: i32) -> (i32, i32) {
    %c0_i32 = arith.constant 0 : i32
    %c0_i32_0 = arith.constant 0 : i32
    %c0_i32_1 = arith.constant 0 : i32
    return %c0_i32, %c0_i32_0 : i32, i32
  }
  func.func @transform_3(%arg0: i32) -> (i32, i32) {
    %c0_i32 = arith.constant 0 : i32
    %c0_i32_0 = arith.constant 0 : i32
    %c0_i32_1 = arith.constant 0 : i32
    return %c0_i32, %c0_i32_0 : i32, i32
  }
  func.func @transform_4(%arg0: i32) -> (i32, i32) {
    %c0_i32 = arith.constant 0 : i32
    %c0_i32_0 = arith.constant 0 : i32
    %c0_i32_1 = arith.constant 0 : i32
    return %c0_i32, %c0_i32_0 : i32, i32
  }
  func.func @transform_5(%arg0: i32) -> (i32, i32) {
    %c0_i32 = arith.constant 0 : i32
    %c0_i32_0 = arith.constant 0 : i32
    %c0_i32_1 = arith.constant 0 : i32
    return %c0_i32, %c0_i32_0 : i32, i32
  }
  func.func @transform_6(%arg0: i32) -> (i32, i32) {
    %c0_i32 = arith.constant 0 : i32
    %c0_i32_0 = arith.constant 0 : i32
    %c0_i32_1 = arith.constant 0 : i32
    return %c0_i32, %c0_i32_0 : i32, i32
  }
  func.func @transform_7(%arg0: i32) -> (i32, i32, i32) {
    %c0_i32 = arith.constant 0 : i32
    %c0_i32_0 = arith.constant 0 : i32
    %c0_i32_1 = arith.constant 0 : i32
    return %arg0, %c0_i32, %c0_i32_0 : i32, i32, i32
  }
  func.func @transform_8(%arg0: i32) -> (i32, i32, i32) {
    %c0_i32 = arith.constant 0 : i32
    %c0_i32_0 = arith.constant 0 : i32
    %c0_i32_1 = arith.constant 0 : i32
    return %arg0, %c0_i32, %c0_i32_0 : i32, i32, i32
  }
  func.func @transform_9(%arg0: i32) -> (i32, i32, i32) {
    %c0_i32 = arith.constant 0 : i32
    %c0_i32_0 = arith.constant 0 : i32
    %c0_i32_1 = arith.constant 0 : i32
    return %arg0, %c0_i32, %c0_i32_0 : i32, i32, i32
  }
}

</mosaic_0001>

<llo_original>
// kernel: attn_block.3
$region0: #{attn_block.3}
  #allocation0 [shape = 'u32[]', space=smem, size = 0x4, offset = 0x4, fixed_abs, tag = 'smem constant byte address 0x4 - core index']
  #allocation1 [shape = 'u32[72,128]{1,0:T(1,128)}', space=vmem, size = 0x9000, scoped, tag = 'internal scratch']
  #allocation2 [shape = 'f32[64,1]{1,0:T(8,128)}', space=vmem, size = 0x8000, scoped, tag = 'scratch operand']
  #allocation3 [shape = 'f32[64,1]{1,0:T(8,128)}', space=vmem, size = 0x8000, scoped, tag = 'scratch operand']
  #allocation4 [shape = 'f32[64,64]{1,0:T(8,128)}', space=vmem, size = 0x8000, scoped, tag = 'scratch operand']
  %s0 = inlined_call_operand.vmem [shape: bf16[2,256,64], index: 0, kind: input, shape index: {}]
  %s1 = inlined_call_operand.vmem [shape: bf16[2,256,64], index: 1, kind: input, shape index: {}]
  %s2 = inlined_call_operand.vmem [shape: bf16[2,256,64], index: 2, kind: input, shape index: {}]
  %s3 = inlined_call_operand.vmem [shape: f32[2,256,64], index: 3, kind: input, shape index: {}]
  %s4 = inlined_call_operand.vmem [shape: f32[1,64], index: 4, kind: input, shape index: {}]
  %s5 = inlined_call_operand.hbm [shape: f32[2,256,64], index: 5, kind: output, shape index: {}]
  %s6 = sld [smem:[#allocation0]]
  $region60: #{attn_block.3} parent=0
    _
  %s8 = ssub.s32 1, %s6
  %s9 = scalar_select 0, %s8, %s6
  $region1: #{attn_block.3} parent=0
    #allocation5 [shape = 'u8[65536]{0}', space=vmem, size = 0x10000, scoped, tag = 'output window, operand 0']
    #allocation6 [shape = 's32[2]{0}', space=sflag, size = 0x8, scoped, tag = 'scoped memory for attn_block.3']
    %10 = vsyncpa [#allocation6], 0
    %s11 = scalar_lea.sflag [#allocation6], 1
    %12 = vsyncpa %s11, 0
    loop: start=0, step=1, limit=10
    $region2: #{attn_block.3} parent=1 // loop_pre_header
      _
    $region3: #{attn_block.3} parent=1 // loop_header
      %s14 = sphi 0, %s18
      %p15 = scmp.ge.s32.totalorder %s14, 10
      %s21 = sphi 0, %s33
      %s22 = sphi 0, %s29
      %s23 = sphi 0, %s21
      %s24 = sphi 0, %s22
      %s25 = sphi 0, %s23
      %s26 = sphi 0, %s24
      %s38 = sphi 0, %s40
      %s41 = sphi 0, %s38
      %s42 = sphi 0, %s41
      %s58 = sphi 0, %s42
      %s64 = sphi 0, %s66
      %s67 = sphi 0, %s64
      %s68 = sphi 0, %s67
      %s84 = sphi 0, %s68
      %s90 = sphi 0, %s92
      %s93 = sphi 0, %s90
      %s94 = sphi 0, %s93
      %s110 = sphi 0, %s94
      %s118 = sphi 0, %s120
      %s121 = sphi 0, %s118
      %s122 = sphi 0, %s121
      %s138 = sphi 0, %s122
      %s142 = sphi 0, %s142
      %s144 = sphi 0, %s142
      %s145 = sphi 0, %s144
      %s159 = sphi 0, %s145
      %s167 = sphi 0, %s169
      %s170 = sphi 0, %s167
      %s171 = sphi 0, %s170
      %s187 = sphi 0, %s171
    $region4: #{attn_block.3} parent=1 // loop_header_branch
      %17 = sbr.rel (%p15) target = $region8
    $region5: #{attn_block.3} parent=1 // loop_body
      %s19 = ssub.s32 %s14, 1
      %s20 = ssub.s32 %s14, 2
      %s27 = sadd.s32 1, %s22
      %p28 = scmp.ge.s32.totalorder %s27, 4
      %s29 = scalar_select %p28, 0, %s27
      %s30 = sadd.s32 1, %s21
      %s31 = scalar_select %p28, %s30, %s21
      %p32 = scmp.ge.s32.totalorder %s31, 2
      %s33 = scalar_select %p32, 0, %s31
      %s34 = ssub.s32 %s21, %s33
      %s35 = ssub.s32 %s22, %s29
      %s36 = sor.u32 %s34, %s35
      %p37 = scmp.eq.s32.totalorder %s36, 0
      %s39 = sadd.s32 %s38, 1
      %s40 = scalar_select %p37, %s38, %s39
      %p43 = pneg %p37
      %p44 = scmp.eq.s32.totalorder %s14, 7
      %p45 = por %p43, %p44
      %p46 = scmp.ne.s32.totalorder %s38, %s41
      %p47 = scmp.eq.s32.totalorder %s14, 0
      %p48 = por %p46, %p47
      %p49 = scmp.ne.s32.totalorder %s38, %s41
      %p50 = scmp.eq.s32.totalorder %s19, 7
      %p51 = por %p49, %p50
      %p52 = scmp.ne.s32.totalorder %s41, %s42
      %p53 = scmp.eq.s32.totalorder %s19, 0
      %p54 = por %p52, %p53
      %p55 = scmp.ne.s32.totalorder %s41, %s42
      %p56 = scmp.eq.s32.totalorder %s20, 7
      %p57 = por %p55, %p56
      %p59 = scmp.ne.s32.totalorder %s42, %s58
      %p60 = scmp.eq.s32.totalorder %s20, 0
      %p61 = por %p59, %p60
      %s62 = ssub.s32 %s21, %s33
      %p63 = scmp.eq.s32.totalorder %s62, 0
      %s65 = sadd.s32 %s64, 1
      %s66 = scalar_select %p63, %s64, %s65
      %p69 = pneg %p63
      %p70 = scmp.eq.s32.totalorder %s14, 7
      %p71 = por %p69, %p70
      %p72 = scmp.ne.s32.totalorder %s64, %s67
      %p73 = scmp.eq.s32.totalorder %s14, 0
      %p74 = por %p72, %p73
      %p75 = scmp.ne.s32.totalorder %s64, %s67
      %p76 = scmp.eq.s32.totalorder %s19, 7
      %p77 = por %p75, %p76
      %p78 = scmp.ne.s32.totalorder %s67, %s68
      %p79 = scmp.eq.s32.totalorder %s19, 0
      %p80 = por %p78, %p79
      %p81 = scmp.ne.s32.totalorder %s67, %s68
      %p82 = scmp.eq.s32.totalorder %s20, 7
      %p83 = por %p81, %p82
      %p85 = scmp.ne.s32.totalorder %s68, %s84
      %p86 = scmp.eq.s32.totalorder %s20, 0
      %p87 = por %p85, %p86
      %s88 = ssub.s32 %s21, %s33
      %p89 = scmp.eq.s32.totalorder %s88, 0
      %s91 = sadd.s32 %s90, 1
      %s92 = scalar_select %p89, %s90, %s91
      %p95 = pneg %p89
      %p96 = scmp.eq.s32.totalorder %s14, 7
      %p97 = por %p95, %p96
      %p98 = scmp.ne.s32.totalorder %s90, %s93
      %p99 = scmp.eq.s32.totalorder %s14, 0
      %p100 = por %p98, %p99
      %p101 = scmp.ne.s32.totalorder %s90, %s93
      %p102 = scmp.eq.s32.totalorder %s19, 7
      %p103 = por %p101, %p102
      %p104 = scmp.ne.s32.totalorder %s93, %s94
      %p105 = scmp.eq.s32.totalorder %s19, 0
      %p106 = por %p104, %p105
      %p107 = scmp.ne.s32.totalorder %s93, %s94
      %p108 = scmp.eq.s32.totalorder %s20, 7
      %p109 = por %p107, %p108
      %p111 = scmp.ne.s32.totalorder %s94, %s110
      %p112 = scmp.eq.s32.totalorder %s20, 0
      %p113 = por %p111, %p112
      %s114 = ssub.s32 %s21, %s33
      %s115 = ssub.s32 %s22, %s29
      %s116 = sor.u32 %s114, %s115
      %p117 = scmp.eq.s32.totalorder %s116, 0
      %s119 = sadd.s32 %s118, 1
      %s120 = scalar_select %p117, %s118, %s119
      %p123 = pneg %p117
      %p124 = scmp.eq.s32.totalorder %s14, 7
      %p125 = por %p123, %p124
      %p126 = scmp.ne.s32.totalorder %s118, %s121
      %p127 = scmp.eq.s32.totalorder %s14, 0
      %p128 = por %p126, %p127
      %p129 = scmp.ne.s32.totalorder %s118, %s121
      %p130 = scmp.eq.s32.totalorder %s19, 7
      %p131 = por %p129, %p130
      %p132 = scmp.ne.s32.totalorder %s121, %s122
      %p133 = scmp.eq.s32.totalorder %s19, 0
      %p134 = por %p132, %p133
      %p135 = scmp.ne.s32.totalorder %s121, %s122
      %p136 = scmp.eq.s32.totalorder %s20, 7
      %p137 = por %p135, %p136
      %p139 = scmp.ne.s32.totalorder %s122, %s138
      %p140 = scmp.eq.s32.totalorder %s20, 0
      %p141 = por %p139, %p140
      %s143 = sadd.s32 %s142, 1
      %p146 = scmp.eq.s32.totalorder %s14, 7
      %p147 = scmp.ne.s32.totalorder %s142, %s144
      %p148 = scmp.eq.s32.totalorder %s14, 0
      %p149 = por %p147, %p148
      %p150 = scmp.ne.s32.totalorder %s142, %s144
      %p151 = scmp.eq.s32.totalorder %s19, 7
      %p152 = por %p150, %p151
      %p153 = scmp.ne.s32.totalorder %s144, %s145
      %p154 = scmp.eq.s32.totalorder %s19, 0
      %p155 = por %p153, %p154
      %p156 = scmp.ne.s32.totalorder %s144, %s145
      %p157 = scmp.eq.s32.totalorder %s20, 7
      %p158 = por %p156, %p157
      %p160 = scmp.ne.s32.totalorder %s145, %s159
      %p161 = scmp.eq.s32.totalorder %s20, 0
      %p162 = por %p160, %p161
      %s163 = ssub.s32 %s21, %s33
      %s164 = ssub.s32 %s22, %s29
      %s165 = sor.u32 %s163, %s164
      %p166 = scmp.eq.s32.totalorder %s165, 0
      %s168 = sadd.s32 %s167, 1
      %s169 = scalar_select %p166, %s167, %s168
      %p172 = pneg %p166
      %p173 = scmp.eq.s32.totalorder %s14, 7
      %p174 = por %p172, %p173
      %p175 = scmp.ne.s32.totalorder %s167, %s170
      %p176 = scmp.eq.s32.totalorder %s14, 0
      %p177 = por %p175, %p176
      %p178 = scmp.ne.s32.totalorder %s167, %s170
      %p179 = scmp.eq.s32.totalorder %s19, 7
      %p180 = por %p178, %p179
      %p181 = scmp.ne.s32.totalorder %s170, %s171
      %p182 = scmp.eq.s32.totalorder %s19, 0
      %p183 = por %p181, %p182
      %p184 = scmp.ne.s32.totalorder %s170, %s171
      %p185 = scmp.eq.s32.totalorder %s20, 7
      %p186 = por %p184, %p185
      %p188 = scmp.ne.s32.totalorder %s171, %s187
      %p189 = scmp.eq.s32.totalorder %s20, 0
      %p190 = por %p188, %p189
      %p191 = scmp.le.s32.totalorder 1, %s14
      %p192 = scmp.lt.s32.totalorder %s14, 9
      %p193 = pnand %p191, %p192
      %p194 = pneg %p193
      // Predicated region
      $region9: #{attn_block.3} parent=5 // pred_check
        _
      $region10: #{attn_block.3} parent=5 // pred_check_branch
        %196 = sbr.rel (%p193) target = $region12
      $region11: #{attn_block.3} parent=5 // pred_region
        %s197 = ssub.s32 %s14, 1
        // Predicated region
        $region13: #{attn_block.3} parent=11 // pred_check
          %p198 = pneg %p155
        $region14: #{attn_block.3} parent=11 // pred_check_branch
          %200 = sbr.rel (%p198) target = $region16
        $region15: #{attn_block.3} parent=11 // pred_region
          _
        $region16: #{attn_block.3} parent=11 // pred_fallthru
          _
      $region12: #{attn_block.3} parent=5 // pred_fallthru
        _
      %p201 = scmp.lt.s32.totalorder %s14, 8
      // Predicated region
      $region17: #{attn_block.3} parent=5 // pred_check
        %p202 = pneg %p201
      $region18: #{attn_block.3} parent=5 // pred_check_branch
        %204 = sbr.rel (%p202) target = $region20
      $region19: #{attn_block.3} parent=5 // pred_region
        // Predicated region
        $region21: #{attn_block.3} parent=19 // pred_check
          %p205 = pneg %p48
        $region22: #{attn_block.3} parent=19 // pred_check_branch
          %207 = sbr.rel (%p205) target = $region24
        $region23: #{attn_block.3} parent=19 // pred_region
          %s208 = smul.u32 8, %s22
          %p209 = scmp.lt.s32.totalorder %s21, 1
          %s210 = scalar_select %p209, %s21, 1
          %p211 = scmp.lt.s32.totalorder %s208, 31
          %s212 = scalar_select %p211, %s208, 31
          %s213 = smul.addr %s210, 32
          %s214 = sadd.s32 %s212, %s213
          %s215 = smul.addr %s214, 4
          %s216 = scalar_lea.vmem %s0, %s215
          %s217 = smul.u32 8, %s22
        $region24: #{attn_block.3} parent=19 // pred_fallthru
          _
        // Predicated region
        $region25: #{attn_block.3} parent=19 // pred_check
          %p218 = pneg %p74
        $region26: #{attn_block.3} parent=19 // pred_check_branch
          %220 = sbr.rel (%p218) target = $region28
        $region27: #{attn_block.3} parent=19 // pred_region
          %p221 = scmp.lt.s32.totalorder %s21, 1
          %s222 = scalar_select %p221, %s21, 1
          %s223 = smul.addr %s222, 32
          %s224 = smul.addr %s223, 4
          %s225 = scalar_lea.vmem %s1, %s224
        $region28: #{attn_block.3} parent=19 // pred_fallthru
          _
        // Predicated region
        $region29: #{attn_block.3} parent=19 // pred_check
          %p226 = pneg %p100
        $region30: #{attn_block.3} parent=19 // pred_check_branch
          %228 = sbr.rel (%p226) target = $region32
        $region31: #{attn_block.3} parent=19 // pred_region
          %p229 = scmp.lt.s32.totalorder %s21, 1
          %s230 = scalar_select %p229, %s21, 1
          %s231 = smul.addr %s230, 32
          %s232 = smul.addr %s231, 4
          %s233 = scalar_lea.vmem %s2, %s232
        $region32: #{attn_block.3} parent=19 // pred_fallthru
          _
        // Predicated region
        $region33: #{attn_block.3} parent=19 // pred_check
          %p234 = pneg %p128
        $region34: #{attn_block.3} parent=19 // pred_check_branch
          %236 = sbr.rel (%p234) target = $region36
        $region35: #{attn_block.3} parent=19 // pred_region
          %s237 = smul.u32 8, %s22
          %p238 = scmp.lt.s32.totalorder %s21, 1
          %s239 = scalar_select %p238, %s21, 1
          %p240 = scmp.lt.s32.totalorder %s237, 31
          %s241 = scalar_select %p240, %s237, 31
          %s242 = smul.addr %s239, 32
          %s243 = sadd.s32 %s241, %s242
          %s244 = smul.addr %s243, 8
          %s245 = scalar_lea.vmem %s3, %s244
          %s246 = smul.u32 8, %s22
        $region36: #{attn_block.3} parent=19 // pred_fallthru
          _
      $region20: #{attn_block.3} parent=5 // pred_fallthru
        _
      %p247 = scmp.le.s32.totalorder 1, %s14
      %p248 = scmp.lt.s32.totalorder %s14, 9
      %p249 = pnand %p247, %p248
      %p250 = pneg %p249
      // Predicated region
      $region37: #{attn_block.3} parent=5 // pred_check
        _
      $region38: #{attn_block.3} parent=5 // pred_check_branch
        %252 = sbr.rel (%p249) target = $region40
      $region39: #{attn_block.3} parent=5 // pred_region
        %s253 = ssub.s32 %s14, 1
        %s254 = smul.u32 8, %s24
        %p255 = scmp.lt.s32.totalorder %s23, 1
        %s256 = scalar_select %p255, %s23, 1
        %p257 = scmp.lt.s32.totalorder %s254, 31
        %s258 = scalar_select %p257, %s254, 31
        %s259 = smul.addr %s256, 32
        %s260 = sadd.s32 %s258, %s259
        %s261 = smul.addr %s260, 4
        %s262 = scalar_lea.vmem %s0, %s261
        %p263 = pneg %p54
        %p264 = pneg %p51
        %p265 = scmp.lt.s32.totalorder %s23, 1
        %s266 = scalar_select %p265, %s23, 1
        %s267 = smul.addr %s266, 32
        %s268 = smul.addr %s267, 4
        %s269 = scalar_lea.vmem %s1, %s268
        %p270 = pneg %p80
        %p271 = pneg %p77
        %p272 = scmp.lt.s32.totalorder %s23, 1
        %s273 = scalar_select %p272, %s23, 1
        %s274 = smul.addr %s273, 32
        %s275 = smul.addr %s274, 4
        %s276 = scalar_lea.vmem %s2, %s275
        %p277 = pneg %p106
        %p278 = pneg %p103
        %s279 = smul.u32 8, %s24
        %p280 = scmp.lt.s32.totalorder %s23, 1
        %s281 = scalar_select %p280, %s23, 1
        %p282 = scmp.lt.s32.totalorder %s279, 31
        %s283 = scalar_select %p282, %s279, 31
        %s284 = smul.addr %s281, 32
        %s285 = sadd.s32 %s283, %s284
        %s286 = smul.addr %s285, 8
        %s287 = scalar_lea.vmem %s3, %s286
        %p288 = pneg %p134
        %p289 = pneg %p131
        %p290 = pneg %p155
        %p291 = pneg %p152
        %p292 = pneg %p183
        %p293 = pneg %p180
        %s294 = sand.u32 %s170, 1
        %s295 = scalar_lea.sflag [#allocation6], %s294
        %s296 = sand.u32 %s170, 1
        %s297 = smul.addr %s296, 64
        %s298 = scalar_lea.vmem [#allocation5], %s297
        %s299 = smul.u32 8, %s24
        %p300 = scmp.lt.s32.totalorder %s23, 1
        %s301 = scalar_select %p300, %s23, 1
        %p302 = scmp.lt.s32.totalorder %s299, 31
        %s303 = scalar_select %p302, %s299, 31
        %s304 = smul.addr %s301, 32
        %s305 = sadd.s32 %s303, %s304
        %s306 = smul.addr %s305, 4
        %s307 = scalar_lea.vmem %s0, %s306
        %s308 = smul.u32 8, %s24
        %p309 = scmp.lt.s32.totalorder %s23, 1
        %s310 = scalar_select %p309, %s23, 1
        %s311 = smul.addr %s310, 32
        %s312 = smul.addr %s311, 4
        %s313 = scalar_lea.vmem %s1, %s312
        %p314 = scmp.lt.s32.totalorder %s23, 1
        %s315 = scalar_select %p314, %s23, 1
        %s316 = smul.addr %s315, 32
        %s317 = smul.addr %s316, 4
        %s318 = scalar_lea.vmem %s2, %s317
        %s319 = smul.u32 8, %s24
        %p320 = scmp.lt.s32.totalorder %s23, 1
        %s321 = scalar_select %p320, %s23, 1
        %p322 = scmp.lt.s32.totalorder %s319, 31
        %s323 = scalar_select %p322, %s319, 31
        %s324 = smul.addr %s321, 32
        %s325 = sadd.s32 %s323, %s324
        %s326 = smul.addr %s325, 8
        %s327 = scalar_lea.vmem %s3, %s326
        %s328 = smul.u32 8, %s24
        %s329 = smul.u32 8, %s24
        %vm331 = vcmask 7168
        %332 = vst.msk [vmem:[#allocation2] sm:$0xff] %vm331, -inf
        %333 = vst.msk [vmem:[#allocation2 + $0x8] sm:$0xff] %vm331, -inf
        %334 = vst.msk [vmem:[#allocation2 + $0x10] sm:$0xff] %vm331, -inf
        %335 = vst.msk [vmem:[#allocation2 + $0x18] sm:$0xff] %vm331, -inf
        %336 = vst.msk [vmem:[#allocation2 + $0x20] sm:$0xff] %vm331, -inf
        %337 = vst.msk [vmem:[#allocation2 + $0x28] sm:$0xff] %vm331, -inf
        %338 = vst.msk [vmem:[#allocation2 + $0x30] sm:$0xff] %vm331, -inf
        %339 = vst.msk [vmem:[#allocation2 + $0x38] sm:$0xff] %vm331, -inf
        %340 = vst.msk [vmem:[#allocation3] sm:$0xff] %vm331, 0.0
        %341 = vst.msk [vmem:[#allocation3 + $0x8] sm:$0xff] %vm331, 0.0
        %342 = vst.msk [vmem:[#allocation3 + $0x10] sm:$0xff] %vm331, 0.0
        %343 = vst.msk [vmem:[#allocation3 + $0x18] sm:$0xff] %vm331, 0.0
        %344 = vst.msk [vmem:[#allocation3 + $0x20] sm:$0xff] %vm331, 0.0
        %345 = vst.msk [vmem:[#allocation3 + $0x28] sm:$0xff] %vm331, 0.0
        %346 = vst.msk [vmem:[#allocation3 + $0x30] sm:$0xff] %vm331, 0.0
        %347 = vst.msk [vmem:[#allocation3 + $0x38] sm:$0xff] %vm331, 0.0
        %vm348 = vcmask 523264
        %349 = vst.msk [vmem:[#allocation4] sm:$0xff] %vm348, 0.0
        %350 = vst.msk [vmem:[#allocation4 + $0x8] sm:$0xff] %vm348, 0.0
        %351 = vst.msk [vmem:[#allocation4 + $0x10] sm:$0xff] %vm348, 0.0
        %352 = vst.msk [vmem:[#allocation4 + $0x18] sm:$0xff] %vm348, 0.0
        %353 = vst.msk [vmem:[#allocation4 + $0x20] sm:$0xff] %vm348, 0.0
        %354 = vst.msk [vmem:[#allocation4 + $0x28] sm:$0xff] %vm348, 0.0
        %355 = vst.msk [vmem:[#allocation4 + $0x30] sm:$0xff] %vm348, 0.0
        %356 = vst.msk [vmem:[#allocation4 + $0x38] sm:$0xff] %vm348, 0.0
        %v357 = vld [vmem:[%s307] sm:$0xf]
        %v358 = vld [vmem:[%s307 + $0x4] sm:$0xf]
        %v359 = vld [vmem:[%s307 + $0x8] sm:$0xf]
        %v360 = vld [vmem:[%s307 + $0xc] sm:$0xf]
        %v361 = vld [vmem:[%s307 + $0x10] sm:$0xf]
        %v362 = vld [vmem:[%s307 + $0x14] sm:$0xf]
        %v363 = vld [vmem:[%s307 + $0x18] sm:$0xf]
        %v364 = vld [vmem:[%s307 + $0x1c] sm:$0xf]
        loop: start=0, step=1, limit=4
        $region41: #{attn_block.3} parent=39 // loop_pre_header
          _
        $region42: #{attn_block.3} parent=39 // loop_header
          %s366 = sphi 0, %s370
          %p367 = scmp.ge.s32.totalorder %s366, 4
        $region43: #{attn_block.3} parent=39 // loop_header_branch
          %369 = sbr.rel (%p367) target = $region47
        $region44: #{attn_block.3} parent=39 // loop_body
          %s371 = smul.u32 %s366, 64
          %s372 = sshra.s32 %s371, 3
          %s373 = sand.u32 %s371, 7
          %s374 = smul.addr %s372, 4
          %s375 = scalar_lea.vmem %s313, %s374
          %v376 = vld [vmem:[%s375] sm:$0xf]
          %v377 = vld [vmem:[%s375 + $0x4] sm:$0xf]
          %v378 = vld [vmem:[%s375 + $0x8] sm:$0xf]
          %v379 = vld [vmem:[%s375 + $0xc] sm:$0xf]
          %v380 = vld [vmem:[%s375 + $0x10] sm:$0xf]
          %v381 = vld [vmem:[%s375 + $0x14] sm:$0xf]
          %v382 = vld [vmem:[%s375 + $0x18] sm:$0xf]
          %v383 = vld [vmem:[%s375 + $0x1c] sm:$0xf]
          %s384 = smul.addr %s372, 4
          %s385 = scalar_lea.vmem %s318, %s384
          %v386 = vld [vmem:[%s385] sm:$0xf]
          %v387 = vld [vmem:[%s385 + $0x4] sm:$0xf]
          %v388 = vld [vmem:[%s385 + $0x8] sm:$0xf]
          %v389 = vld [vmem:[%s385 + $0xc] sm:$0xf]
          %v390 = vld [vmem:[%s385 + $0x10] sm:$0xf]
          %v391 = vld [vmem:[%s385 + $0x14] sm:$0xf]
          %v392 = vld [vmem:[%s385 + $0x18] sm:$0xf]
          %v393 = vld [vmem:[%s385 + $0x1c] sm:$0xf]
          %v402 = vunpack.c.l.b16 %v357
          %v403 = vunpack.c.l.b16 %v358
          %v404 = vunpack.c.l.b16 %v359
          %v405 = vunpack.c.l.b16 %v360
          %v406 = vunpack.c.l.b16 %v361
          %v407 = vunpack.c.l.b16 %v362
          %v408 = vunpack.c.l.b16 %v363
          %v409 = vunpack.c.l.b16 %v364
          %v410 = vpack.c.b16 %v403, %v402
          %v411 = vpack.c.b16 %v405, %v404
          %v412 = vpack.c.b16 %v407, %v406
          %v413 = vpack.c.b16 %v409, %v408
          %v422 = vunpack.c.l.b16 %v376
          %v423 = vunpack.c.l.b16 %v377
          %v424 = vunpack.c.l.b16 %v378
          %v425 = vunpack.c.l.b16 %v379
          %v426 = vunpack.c.l.b16 %v380
          %v427 = vunpack.c.l.b16 %v381
          %v428 = vunpack.c.l.b16 %v382
          %v429 = vunpack.c.l.b16 %v383
          %v430 = vpack.c.b16 %v423, %v422
          %v431 = vpack.c.b16 %v425, %v424
          %v432 = vpack.c.b16 %v427, %v426
          %v433 = vpack.c.b16 %v429, %v428
          %v435 = vsel %vm348, %v410, 0
          %v438 = vsel %vm348, %v411, 0
          %v441 = vsel %vm348, %v412, 0
          %v444 = vsel %vm348, %v413, 0
          %v447 = vsel %vm348, %v430, 0
          %v450 = vsel %vm348, %v431, 0
          %v453 = vsel %vm348, %v432, 0
          %v456 = vsel %vm348, %v433, 0
          %458 = vmatpush.bf16.xpose.msra.mxu0 0
          %459 = vmatpush.bf16.xpose.msra.mxu0 0
          %460 = vmatpush.bf16.xpose.msra.mxu0 0
          %461 = vmatpush.bf16.xpose.msra.mxu0 0
          %462 = vmatpush.bf16.xpose.msra.mxu0 %v456
          %463 = vmatpush.bf16.xpose.msra.mxu0 %v453
          %464 = vmatpush.bf16.xpose.msra.mxu0 %v450
          %465 = vmatpush.bf16.xpose.msra.mxu0 %v447
          %466 = vmatmul.bf16.gmra.mxu0 %v435
          %v467 = vpop.f32.mrf.mxu0
          %v468 = vadd.f32 0.0, %v467
          %v469 = vpop.f32.mrf.mxu0
          %v470 = vadd.f32 0.0, %v469
          %471 = vmatmul.bf16.gmra.mxu0 %v438
          %v472 = vpop.f32.mrf.mxu0
          %v473 = vadd.f32 0.0, %v472
          %v474 = vpop.f32.mrf.mxu0
          %v475 = vadd.f32 0.0, %v474
          %476 = vmatmul.bf16.gmra.mxu0 %v441
          %v477 = vpop.f32.mrf.mxu0
          %v478 = vadd.f32 0.0, %v477
          %v479 = vpop.f32.mrf.mxu0
          %v480 = vadd.f32 0.0, %v479
          %481 = vmatmul.bf16.gmra.mxu0 %v444
          %v482 = vpop.f32.mrf.mxu0
          %v483 = vadd.f32 0.0, %v482
          %v484 = vpop.f32.mrf.mxu0
          %v485 = vadd.f32 0.0, %v484
          %486 = vdwg.mxu0
          %v487 = vld [vmem:[#allocation2] sm:$0xff]
          %v488 = vld [vmem:[#allocation2 + $0x8] sm:$0xff]
          %v489 = vld [vmem:[#allocation2 + $0x10] sm:$0xff]
          %v490 = vld [vmem:[#allocation2 + $0x18] sm:$0xff]
          %v491 = vld [vmem:[#allocation2 + $0x20] sm:$0xff]
          %v492 = vld [vmem:[#allocation2 + $0x28] sm:$0xff]
          %v493 = vld [vmem:[#allocation2 + $0x30] sm:$0xff]
          %v494 = vld [vmem:[#allocation2 + $0x38] sm:$0xff]
          %v495 = vsel %vm348, %v468, -inf
          %496 = vmax.xlane.f32.xlu0 %v495
          %v497 = vpop.xlane.xlu0 %496
          %v498 = vsel %vm348, %v470, -inf
          %499 = vmax.xlane.f32.xlu0 %v498
          %v500 = vpop.xlane.xlu0 %499
          %v501 = vsel %vm348, %v473, -inf
          %502 = vmax.xlane.f32.xlu0 %v501
          %v503 = vpop.xlane.xlu0 %502
          %v504 = vsel %vm348, %v475, -inf
          %505 = vmax.xlane.f32.xlu0 %v504
          %v506 = vpop.xlane.xlu0 %505
          %v507 = vsel %vm348, %v478, -inf
          %508 = vmax.xlane.f32.xlu0 %v507
          %v509 = vpop.xlane.xlu0 %508
          %v510 = vsel %vm348, %v480, -inf
          %511 = vmax.xlane.f32.xlu0 %v510
          %v512 = vpop.xlane.xlu0 %511
          %v513 = vsel %vm348, %v483, -inf
          %514 = vmax.xlane.f32.xlu0 %v513
          %v515 = vpop.xlane.xlu0 %514
          %v516 = vsel %vm348, %v485, -inf
          %517 = vmax.xlane.f32.xlu0 %v516
          %v518 = vpop.xlane.xlu0 %517
          %v519 = vmax.f32 %v487, %v497
          %v520 = vmax.f32 %v488, %v500
          %v521 = vmax.f32 %v489, %v503
          %v522 = vmax.f32 %v490, %v506
          %v523 = vmax.f32 %v491, %v509
          %v524 = vmax.f32 %v492, %v512
          %v525 = vmax.f32 %v493, %v515
          %v526 = vmax.f32 %v494, %v518
          %v527 = vsub.f32 %v487, %v519
          %v528 = vsub.f32 %v488, %v520
          %v529 = vsub.f32 %v489, %v521
          %v530 = vsub.f32 %v490, %v522
          %v531 = vsub.f32 %v491, %v523
          %v532 = vsub.f32 %v492, %v524
          %v533 = vsub.f32 %v493, %v525
          %v534 = vsub.f32 %v494, %v526
          %v535 = vmul.f32 %v527, 1.442695
          %v536 = vpow.pop %v535
          %v537 = vmul.f32 %v528, 1.442695
          %v538 = vpow.pop %v537
          %v539 = vmul.f32 %v529, 1.442695
          %v540 = vpow.pop %v539
          %v541 = vmul.f32 %v530, 1.442695
          %v542 = vpow.pop %v541
          %v543 = vmul.f32 %v531, 1.442695
          %v544 = vpow.pop %v543
          %v545 = vmul.f32 %v532, 1.442695
          %v546 = vpow.pop %v545
          %v547 = vmul.f32 %v533, 1.442695
          %v548 = vpow.pop %v547
          %v549 = vmul.f32 %v534, 1.442695
          %v550 = vpow.pop %v549
          %552 = vset.pattern.permute.xlu0 0
          %553 = vperm.xlu0 %552, %v519
          %v554 = vpop.permute.xlu0 %553
          %557 = vset.pattern.permute.xlu0 0
          %558 = vperm.xlu0 %557, %v520
          %v559 = vpop.permute.xlu0 %558
          %562 = vset.pattern.permute.xlu0 0
          %563 = vperm.xlu0 %562, %v521
          %v564 = vpop.permute.xlu0 %563
          %567 = vset.pattern.permute.xlu0 0
          %568 = vperm.xlu0 %567, %v522
          %v569 = vpop.permute.xlu0 %568
          %572 = vset.pattern.permute.xlu0 0
          %573 = vperm.xlu0 %572, %v523
          %v574 = vpop.permute.xlu0 %573
          %577 = vset.pattern.permute.xlu0 0
          %578 = vperm.xlu0 %577, %v524
          %v579 = vpop.permute.xlu0 %578
          %582 = vset.pattern.permute.xlu0 0
          %583 = vperm.xlu0 %582, %v525
          %v584 = vpop.permute.xlu0 %583
          %587 = vset.pattern.permute.xlu0 0
          %588 = vperm.xlu0 %587, %v526
          %v589 = vpop.permute.xlu0 %588
          %v591 = vsub.f32 %v468, %v554
          %v592 = vsub.f32 %v470, %v559
          %v593 = vsub.f32 %v473, %v564
          %v594 = vsub.f32 %v475, %v569
          %v595 = vsub.f32 %v478, %v574
          %v596 = vsub.f32 %v480, %v579
          %v597 = vsub.f32 %v483, %v584
          %v598 = vsub.f32 %v485, %v589
          %v599 = vmul.f32 %v591, 1.442695
          %v600 = vpow.pop %v599
          %v601 = vmul.f32 %v592, 1.442695
          %v602 = vpow.pop %v601
          %v603 = vmul.f32 %v593, 1.442695
          %v604 = vpow.pop %v603
          %v605 = vmul.f32 %v594, 1.442695
          %v606 = vpow.pop %v605
          %v607 = vmul.f32 %v595, 1.442695
          %v608 = vpow.pop %v607
          %v609 = vmul.f32 %v596, 1.442695
          %v610 = vpow.pop %v609
          %v611 = vmul.f32 %v597, 1.442695
          %v612 = vpow.pop %v611
          %v613 = vmul.f32 %v598, 1.442695
          %v614 = vpow.pop %v613
          %v615 = vld [vmem:[#allocation3] sm:$0xff]
          %v616 = vld [vmem:[#allocation3 + $0x8] sm:$0xff]
          %v617 = vld [vmem:[#allocation3 + $0x10] sm:$0xff]
          %v618 = vld [vmem:[#allocation3 + $0x18] sm:$0xff]
          %v619 = vld [vmem:[#allocation3 + $0x20] sm:$0xff]
          %v620 = vld [vmem:[#allocation3 + $0x28] sm:$0xff]
          %v621 = vld [vmem:[#allocation3 + $0x30] sm:$0xff]
          %v622 = vld [vmem:[#allocation3 + $0x38] sm:$0xff]
          %v623 = vmul.f32 %v536, %v615
          %v624 = vmul.f32 %v538, %v616
          %v625 = vmul.f32 %v540, %v617
          %v626 = vmul.f32 %v542, %v618
          %v627 = vmul.f32 %v544, %v619
          %v628 = vmul.f32 %v546, %v620
          %v629 = vmul.f32 %v548, %v621
          %v630 = vmul.f32 %v550, %v622
          %v631 = vsel %vm348, %v600, 0.0
          %632 = vadd.xlane.f32.xlu0 %v631
          %v633 = vpop.xlane.xlu0 %632
          %v634 = vsel %vm348, %v602, 0.0
          %635 = vadd.xlane.f32.xlu0 %v634
          %v636 = vpop.xlane.xlu0 %635
          %v637 = vsel %vm348, %v604, 0.0
          %638 = vadd.xlane.f32.xlu0 %v637
          %v639 = vpop.xlane.xlu0 %638
          %v640 = vsel %vm348, %v606, 0.0
          %641 = vadd.xlane.f32.xlu0 %v640
          %v642 = vpop.xlane.xlu0 %641
          %v643 = vsel %vm348, %v608, 0.0
          %644 = vadd.xlane.f32.xlu0 %v643
          %v645 = vpop.xlane.xlu0 %644
          %v646 = vsel %vm348, %v610, 0.0
          %647 = vadd.xlane.f32.xlu0 %v646
          %v648 = vpop.xlane.xlu0 %647
          %v649 = vsel %vm348, %v612, 0.0
          %650 = vadd.xlane.f32.xlu0 %v649
          %v651 = vpop.xlane.xlu0 %650
          %v652 = vsel %vm348, %v614, 0.0
          %653 = vadd.xlane.f32.xlu0 %v652
          %v654 = vpop.xlane.xlu0 %653
          %v655 = vadd.f32 %v623, %v633
          %v656 = vadd.f32 %v624, %v636
          %v657 = vadd.f32 %v625, %v639
          %v658 = vadd.f32 %v626, %v642
          %v659 = vadd.f32 %v627, %v645
          %v660 = vadd.f32 %v628, %v648
          %v661 = vadd.f32 %v629, %v651
          %v662 = vadd.f32 %v630, %v654
          %663 = vst.msk [vmem:[#allocation3] sm:$0xff] %vm331, %v655
          %664 = vst.msk [vmem:[#allocation3 + $0x8] sm:$0xff] %vm331, %v656
          %665 = vst.msk [vmem:[#allocation3 + $0x10] sm:$0xff] %vm331, %v657
          %666 = vst.msk [vmem:[#allocation3 + $0x18] sm:$0xff] %vm331, %v658
          %667 = vst.msk [vmem:[#allocation3 + $0x20] sm:$0xff] %vm331, %v659
          %668 = vst.msk [vmem:[#allocation3 + $0x28] sm:$0xff] %vm331, %v660
          %669 = vst.msk [vmem:[#allocation3 + $0x30] sm:$0xff] %vm331, %v661
          %670 = vst.msk [vmem:[#allocation3 + $0x38] sm:$0xff] %vm331, %v662
          %v671 = vld [vmem:[#allocation4] sm:$0xff]
          %v672 = vld [vmem:[#allocation4 + $0x8] sm:$0xff]
          %v673 = vld [vmem:[#allocation4 + $0x10] sm:$0xff]
          %v674 = vld [vmem:[#allocation4 + $0x18] sm:$0xff]
          %v675 = vld [vmem:[#allocation4 + $0x20] sm:$0xff]
          %v676 = vld [vmem:[#allocation4 + $0x28] sm:$0xff]
          %v677 = vld [vmem:[#allocation4 + $0x30] sm:$0xff]
          %v678 = vld [vmem:[#allocation4 + $0x38] sm:$0xff]
          %680 = vset.pattern.permute.xlu0 0
          %681 = vperm.xlu0 %680, %v536
          %v682 = vpop.permute.xlu0 %681
          %685 = vset.pattern.permute.xlu0 0
          %686 = vperm.xlu0 %685, %v538
          %v687 = vpop.permute.xlu0 %686
          %690 = vset.pattern.permute.xlu0 0
          %691 = vperm.xlu0 %690, %v540
          %v692 = vpop.permute.xlu0 %691
          %695 = vset.pattern.permute.xlu0 0
          %696 = vperm.xlu0 %695, %v542
          %v697 = vpop.permute.xlu0 %696
          %700 = vset.pattern.permute.xlu0 0
          %701 = vperm.xlu0 %700, %v544
          %v702 = vpop.permute.xlu0 %701
          %705 = vset.pattern.permute.xlu0 0
          %706 = vperm.xlu0 %705, %v546
          %v707 = vpop.permute.xlu0 %706
          %710 = vset.pattern.permute.xlu0 0
          %711 = vperm.xlu0 %710, %v548
          %v712 = vpop.permute.xlu0 %711
          %715 = vset.pattern.permute.xlu0 0
          %716 = vperm.xlu0 %715, %v550
          %v717 = vpop.permute.xlu0 %716
          %v719 = vmul.f32 %v682, %v671
          %v720 = vmul.f32 %v687, %v672
          %v721 = vmul.f32 %v692, %v673
          %v722 = vmul.f32 %v697, %v674
          %v723 = vmul.f32 %v702, %v675
          %v724 = vmul.f32 %v707, %v676
          %v725 = vmul.f32 %v712, %v677
          %v726 = vmul.f32 %v717, %v678
          %v727 = vpack.c.bf16 %v602, %v600
          %v728 = vpack.c.bf16 %v606, %v604
          %v729 = vpack.c.bf16 %v610, %v608
          %v730 = vpack.c.bf16 %v614, %v612
          %v739 = vunpack.c.l.b16 %v386
          %v740 = vunpack.c.l.b16 %v387
          %v741 = vunpack.c.l.b16 %v388
          %v742 = vunpack.c.l.b16 %v389
          %v743 = vunpack.c.l.b16 %v390
          %v744 = vunpack.c.l.b16 %v391
          %v745 = vunpack.c.l.b16 %v392
          %v746 = vunpack.c.l.b16 %v393
          %v747 = vpack.c.b16 %v740, %v739
          %v748 = vpack.c.b16 %v742, %v741
          %v749 = vpack.c.b16 %v744, %v743
          %v750 = vpack.c.b16 %v746, %v745
          %v756 = vsel %vm348, %v727, 0
          %v759 = vsel %vm348, %v728, 0
          %v762 = vsel %vm348, %v729, 0
          %v765 = vsel %vm348, %v730, 0
          %767 = vmatpush.bf16.msra.mxu0 0
          %768 = vmatpush.bf16.msra.mxu0 0
          %769 = vmatpush.bf16.msra.mxu0 0
          %770 = vmatpush.bf16.msra.mxu0 0
          %771 = vmatpush.bf16.msra.mxu0 %v750
          %772 = vmatpush.bf16.msra.mxu0 %v749
          %773 = vmatpush.bf16.msra.mxu0 %v748
          %774 = vmatpush.bf16.msra.mxu0 %v747
          %775 = vmatmul.bf16.gmra.mxu0 %v756
          %v776 = vpop.f32.mrf.mxu0
          %v777 = vadd.f32 0.0, %v776
          %v778 = vpop.f32.mrf.mxu0
          %v779 = vadd.f32 0.0, %v778
          %780 = vmatmul.bf16.gmra.mxu0 %v759
          %v781 = vpop.f32.mrf.mxu0
          %v782 = vadd.f32 0.0, %v781
          %v783 = vpop.f32.mrf.mxu0
          %v784 = vadd.f32 0.0, %v783
          %785 = vmatmul.bf16.gmra.mxu0 %v762
          %v786 = vpop.f32.mrf.mxu0
          %v787 = vadd.f32 0.0, %v786
          %v788 = vpop.f32.mrf.mxu0
          %v789 = vadd.f32 0.0, %v788
          %790 = vmatmul.bf16.gmra.mxu0 %v765
          %v791 = vpop.f32.mrf.mxu0
          %v792 = vadd.f32 0.0, %v791
          %v793 = vpop.f32.mrf.mxu0
          %v794 = vadd.f32 0.0, %v793
          %795 = vdwg.mxu0
          %v796 = vadd.f32 %v719, %v777
          %v797 = vadd.f32 %v720, %v779
          %v798 = vadd.f32 %v721, %v782
          %v799 = vadd.f32 %v722, %v784
          %v800 = vadd.f32 %v723, %v787
          %v801 = vadd.f32 %v724, %v789
          %v802 = vadd.f32 %v725, %v792
          %v803 = vadd.f32 %v726, %v794
          %804 = vst.msk [vmem:[#allocation4] sm:$0xff] %vm348, %v796
          %805 = vst.msk [vmem:[#allocation4 + $0x8] sm:$0xff] %vm348, %v797
          %806 = vst.msk [vmem:[#allocation4 + $0x10] sm:$0xff] %vm348, %v798
          %807 = vst.msk [vmem:[#allocation4 + $0x18] sm:$0xff] %vm348, %v799
          %808 = vst.msk [vmem:[#allocation4 + $0x20] sm:$0xff] %vm348, %v800
          %809 = vst.msk [vmem:[#allocation4 + $0x28] sm:$0xff] %vm348, %v801
          %810 = vst.msk [vmem:[#allocation4 + $0x30] sm:$0xff] %vm348, %v802
          %811 = vst.msk [vmem:[#allocation4 + $0x38] sm:$0xff] %vm348, %v803
          %812 = vst.msk [vmem:[#allocation2] sm:$0xff] %vm331, %v519
          %813 = vst.msk [vmem:[#allocation2 + $0x8] sm:$0xff] %vm331, %v520
          %814 = vst.msk [vmem:[#allocation2 + $0x10] sm:$0xff] %vm331, %v521
          %815 = vst.msk [vmem:[#allocation2 + $0x18] sm:$0xff] %vm331, %v522
          %816 = vst.msk [vmem:[#allocation2 + $0x20] sm:$0xff] %vm331, %v523
          %817 = vst.msk [vmem:[#allocation2 + $0x28] sm:$0xff] %vm331, %v524
          %818 = vst.msk [vmem:[#allocation2 + $0x30] sm:$0xff] %vm331, %v525
          %819 = vst.msk [vmem:[#allocation2 + $0x38] sm:$0xff] %vm331, %v526
        $region45: #{attn_block.3} parent=39 // loop_footer
          %s370 = sadd.s32 1, %s366
        $region46: #{attn_block.3} parent=39 // loop_footer_branch
          %365 = sbr.rel target = $region42
        $region47: #{attn_block.3} parent=39 // loop_exit
          _
        %v820 = vld [vmem:[#allocation4] sm:$0xff]
        %v821 = vld [vmem:[#allocation4 + $0x8] sm:$0xff]
        %v822 = vld [vmem:[#allocation4 + $0x10] sm:$0xff]
        %v823 = vld [vmem:[#allocation4 + $0x18] sm:$0xff]
        %v824 = vld [vmem:[#allocation4 + $0x20] sm:$0xff]
        %v825 = vld [vmem:[#allocation4 + $0x28] sm:$0xff]
        %v826 = vld [vmem:[#allocation4 + $0x30] sm:$0xff]
        %v827 = vld [vmem:[#allocation4 + $0x38] sm:$0xff]
        %v828 = vld [vmem:[#allocation3] sm:$0xff]
        %v829 = vld [vmem:[#allocation3 + $0x8] sm:$0xff]
        %v830 = vld [vmem:[#allocation3 + $0x10] sm:$0xff]
        %v831 = vld [vmem:[#allocation3 + $0x18] sm:$0xff]
        %v832 = vld [vmem:[#allocation3 + $0x20] sm:$0xff]
        %v833 = vld [vmem:[#allocation3 + $0x28] sm:$0xff]
        %v834 = vld [vmem:[#allocation3 + $0x30] sm:$0xff]
        %v835 = vld [vmem:[#allocation3 + $0x38] sm:$0xff]
        %v836 = vrcp.pop %v828
        %v837 = vmul.f32 %v828, %v836
        %v838 = vsub.f32 1.0, %v837
        %v839 = vmul.f32 %v836, %v838
        %v840 = vadd.f32 %v836, %v839
        %vm841 = vweird.f32 %v828
        %vm842 = vweird.f32 %v836
        %vm843 = vmor %vm841, %vm842
        %v844 = vsel %vm843, %v836, %v840
        %v845 = vand.u32 2147483647, %v828
        %vm846 = vcmp.eq.f32.partialorder %v845, 8.507059e+37
        %v847 = vand.u32 %v828, 2147483648
        %v848 = vor.u32 1.1754944e-38, %v847
        %v849 = vsel %vm846, %v848, %v844
        %v850 = vrcp.pop %v829
        %v851 = vmul.f32 %v829, %v850
        %v852 = vsub.f32 1.0, %v851
        %v853 = vmul.f32 %v850, %v852
        %v854 = vadd.f32 %v850, %v853
        %vm855 = vweird.f32 %v829
        %vm856 = vweird.f32 %v850
        %vm857 = vmor %vm855, %vm856
        %v858 = vsel %vm857, %v850, %v854
        %v859 = vand.u32 2147483647, %v829
        %vm860 = vcmp.eq.f32.partialorder %v859, 8.507059e+37
        %v861 = vand.u32 %v829, 2147483648
        %v862 = vor.u32 1.1754944e-38, %v861
        %v863 = vsel %vm860, %v862, %v858
        %v864 = vrcp.pop %v830
        %v865 = vmul.f32 %v830, %v864
        %v866 = vsub.f32 1.0, %v865
        %v867 = vmul.f32 %v864, %v866
        %v868 = vadd.f32 %v864, %v867
        %vm869 = vweird.f32 %v830
        %vm870 = vweird.f32 %v864
        %vm871 = vmor %vm869, %vm870
        %v872 = vsel %vm871, %v864, %v868
        %v873 = vand.u32 2147483647, %v830
        %vm874 = vcmp.eq.f32.partialorder %v873, 8.507059e+37
        %v875 = vand.u32 %v830, 2147483648
        %v876 = vor.u32 1.1754944e-38, %v875
        %v877 = vsel %vm874, %v876, %v872
        %v878 = vrcp.pop %v831
        %v879 = vmul.f32 %v831, %v878
        %v880 = vsub.f32 1.0, %v879
        %v881 = vmul.f32 %v878, %v880
        %v882 = vadd.f32 %v878, %v881
        %vm883 = vweird.f32 %v831
        %vm884 = vweird.f32 %v878
        %vm885 = vmor %vm883, %vm884
        %v886 = vsel %vm885, %v878, %v882
        %v887 = vand.u32 2147483647, %v831
        %vm888 = vcmp.eq.f32.partialorder %v887, 8.507059e+37
        %v889 = vand.u32 %v831, 2147483648
        %v890 = vor.u32 1.1754944e-38, %v889
        %v891 = vsel %vm888, %v890, %v886
        %v892 = vrcp.pop %v832
        %v893 = vmul.f32 %v832, %v892
        %v894 = vsub.f32 1.0, %v893
        %v895 = vmul.f32 %v892, %v894
        %v896 = vadd.f32 %v892, %v895
        %vm897 = vweird.f32 %v832
        %vm898 = vweird.f32 %v892
        %vm899 = vmor %vm897, %vm898
        %v900 = vsel %vm899, %v892, %v896
        %v901 = vand.u32 2147483647, %v832
        %vm902 = vcmp.eq.f32.partialorder %v901, 8.507059e+37
        %v903 = vand.u32 %v832, 2147483648
        %v904 = vor.u32 1.1754944e-38, %v903
        %v905 = vsel %vm902, %v904, %v900
        %v906 = vrcp.pop %v833
        %v907 = vmul.f32 %v833, %v906
        %v908 = vsub.f32 1.0, %v907
        %v909 = vmul.f32 %v906, %v908
        %v910 = vadd.f32 %v906, %v909
        %vm911 = vweird.f32 %v833
        %vm912 = vweird.f32 %v906
        %vm913 = vmor %vm911, %vm912
        %v914 = vsel %vm913, %v906, %v910
        %v915 = vand.u32 2147483647, %v833
        %vm916 = vcmp.eq.f32.partialorder %v915, 8.507059e+37
        %v917 = vand.u32 %v833, 2147483648
        %v918 = vor.u32 1.1754944e-38, %v917
        %v919 = vsel %vm916, %v918, %v914
        %v920 = vrcp.pop %v834
        %v921 = vmul.f32 %v834, %v920
        %v922 = vsub.f32 1.0, %v921
        %v923 = vmul.f32 %v920, %v922
        %v924 = vadd.f32 %v920, %v923
        %vm925 = vweird.f32 %v834
        %vm926 = vweird.f32 %v920
        %vm927 = vmor %vm925, %vm926
        %v928 = vsel %vm927, %v920, %v924
        %v929 = vand.u32 2147483647, %v834
        %vm930 = vcmp.eq.f32.partialorder %v929, 8.507059e+37
        %v931 = vand.u32 %v834, 2147483648
        %v932 = vor.u32 1.1754944e-38, %v931
        %v933 = vsel %vm930, %v932, %v928
        %v934 = vrcp.pop %v835
        %v935 = vmul.f32 %v835, %v934
        %v936 = vsub.f32 1.0, %v935
        %v937 = vmul.f32 %v934, %v936
        %v938 = vadd.f32 %v934, %v937
        %vm939 = vweird.f32 %v835
        %vm940 = vweird.f32 %v934
        %vm941 = vmor %vm939, %vm940
        %v942 = vsel %vm941, %v934, %v938
        %v943 = vand.u32 2147483647, %v835
        %vm944 = vcmp.eq.f32.partialorder %v943, 8.507059e+37
        %v945 = vand.u32 %v835, 2147483648
        %v946 = vor.u32 1.1754944e-38, %v945
        %v947 = vsel %vm944, %v946, %v942
        %949 = vset.pattern.permute.xlu0 0
        %950 = vperm.xlu0 %949, %v849
        %v951 = vpop.permute.xlu0 %950
        %954 = vset.pattern.permute.xlu0 0
        %955 = vperm.xlu0 %954, %v863
        %v956 = vpop.permute.xlu0 %955
        %959 = vset.pattern.permute.xlu0 0
        %960 = vperm.xlu0 %959, %v877
        %v961 = vpop.permute.xlu0 %960
        %964 = vset.pattern.permute.xlu0 0
        %965 = vperm.xlu0 %964, %v891
        %v966 = vpop.permute.xlu0 %965
        %969 = vset.pattern.permute.xlu0 0
        %970 = vperm.xlu0 %969, %v905
        %v971 = vpop.permute.xlu0 %970
        %974 = vset.pattern.permute.xlu0 0
        %975 = vperm.xlu0 %974, %v919
        %v976 = vpop.permute.xlu0 %975
        %979 = vset.pattern.permute.xlu0 0
        %980 = vperm.xlu0 %979, %v933
        %v981 = vpop.permute.xlu0 %980
        %984 = vset.pattern.permute.xlu0 0
        %985 = vperm.xlu0 %984, %v947
        %v986 = vpop.permute.xlu0 %985
        %v988 = vmul.f32 %v820, %v951
        %v989 = vmul.f32 %v821, %v956
        %v990 = vmul.f32 %v822, %v961
        %v991 = vmul.f32 %v823, %v966
        %v992 = vmul.f32 %v824, %v971
        %v993 = vmul.f32 %v825, %v976
        %v994 = vmul.f32 %v826, %v981
        %v995 = vmul.f32 %v827, %v986
        %v996 = vld [vmem:[%s4] sm:$0x1]
        %v998 = vperm.slane %v996, 0
        %v1000 = vadd.f32 %v988, %v998
        %v1001 = vadd.f32 %v989, %v998
        %v1002 = vadd.f32 %v990, %v998
        %v1003 = vadd.f32 %v991, %v998
        %v1004 = vadd.f32 %v992, %v998
        %v1005 = vadd.f32 %v993, %v998
        %v1006 = vadd.f32 %v994, %v998
        %v1007 = vadd.f32 %v995, %v998
        %v1008 = vld [vmem:[%s327] sm:$0xff]
        %v1009 = vld [vmem:[%s327 + $0x8] sm:$0xff]
        %v1010 = vld [vmem:[%s327 + $0x10] sm:$0xff]
        %v1011 = vld [vmem:[%s327 + $0x18] sm:$0xff]
        %v1012 = vld [vmem:[%s327 + $0x20] sm:$0xff]
        %v1013 = vld [vmem:[%s327 + $0x28] sm:$0xff]
        %v1014 = vld [vmem:[%s327 + $0x30] sm:$0xff]
        %v1015 = vld [vmem:[%s327 + $0x38] sm:$0xff]
        %v1016 = vadd.f32 %v1008, %v1000
        %v1017 = vadd.f32 %v1009, %v1001
        %v1018 = vadd.f32 %v1010, %v1002
        %v1019 = vadd.f32 %v1011, %v1003
        %v1020 = vadd.f32 %v1012, %v1004
        %v1021 = vadd.f32 %v1013, %v1005
        %v1022 = vadd.f32 %v1014, %v1006
        %v1023 = vadd.f32 %v1015, %v1007
        %1024 = vst.msk [vmem:[%s298] sm:$0xff] %vm348, %v1016
        %1025 = vst.msk [vmem:[%s298 + $0x8] sm:$0xff] %vm348, %v1017
        %1026 = vst.msk [vmem:[%s298 + $0x10] sm:$0xff] %vm348, %v1018
        %1027 = vst.msk [vmem:[%s298 + $0x18] sm:$0xff] %vm348, %v1019
        %1028 = vst.msk [vmem:[%s298 + $0x20] sm:$0xff] %vm348, %v1020
        %1029 = vst.msk [vmem:[%s298 + $0x28] sm:$0xff] %vm348, %v1021
        %1030 = vst.msk [vmem:[%s298 + $0x30] sm:$0xff] %vm348, %v1022
        %1031 = vst.msk [vmem:[%s298 + $0x38] sm:$0xff] %vm348, %v1023
        %s1032 = sand.u32 %s170, 1
        %s1033 = scalar_lea.sflag [#allocation6], %s1032
        %s1034 = sand.u32 %s170, 1
        %s1035 = smul.addr %s1034, 64
        %s1036 = scalar_lea.vmem [#allocation5], %s1035
        // Predicated region
        $region48: #{attn_block.3} parent=39 // pred_check
          %p1037 = pneg %p180
        $region49: #{attn_block.3} parent=39 // pred_check_branch
          %1039 = sbr.rel (%p1037) target = $region51
        $region50: #{attn_block.3} parent=39 // pred_region
          %s1040 = smul.u32 8, %s24
          %1042 = vsyncadd %s1033, 0
          %s1043 = smul.addr %s23, 32
          %s1044 = sadd.s32 %s1040, %s1043
          %s1045 = smul.addr %s1044, 8
          %s1046 = scalar_lea.hbm %s5, %s1045
          %s1047 = sshll.u32 %s1036, 4
          %s1048 = int_to_ptr.vmem [resolvable:$true] %s1047
          %s1049 = sshll.u32 %s1046, 4
          %s1050 = int_to_ptr.hbm [resolvable:$true] %s1049
          %1055 = dma.vmem_to_hbm [thread:$0]  %s1048, 1024, %s1050, %s1033, 128, 128, 8
        $region51: #{attn_block.3} parent=39 // pred_fallthru
          _
      $region40: #{attn_block.3} parent=5 // pred_fallthru
        _
      %p1056 = scmp.le.s32.totalorder 2, %s14
      // Predicated region
      $region52: #{attn_block.3} parent=5 // pred_check
        %p1057 = pneg %p1056
      $region53: #{attn_block.3} parent=5 // pred_check_branch
        %1059 = sbr.rel (%p1057) target = $region55
      $region54: #{attn_block.3} parent=5 // pred_region
        %s1060 = ssub.s32 %s14, 2
        // Predicated region
        $region56: #{attn_block.3} parent=54 // pred_check
          %p1061 = pneg %p186
        $region57: #{attn_block.3} parent=54 // pred_check_branch
          %1063 = sbr.rel (%p1061) target = $region59
        $region58: #{attn_block.3} parent=54 // pred_region
          %s1064 = sand.u32 %s171, 1
          %s1065 = scalar_lea.sflag [#allocation6], %s1064
          %s1066 = sand.u32 %s171, 1
          %s1067 = smul.addr %s1066, 64
          %s1068 = scalar_lea.vmem [#allocation5], %s1067
          %1070 = dma.done %s1065, 1024
        $region59: #{attn_block.3} parent=54 // pred_fallthru
          _
      $region55: #{attn_block.3} parent=5 // pred_fallthru
        _
    $region6: #{attn_block.3} parent=1 // loop_footer
      %s18 = sadd.s32 1, %s14
    $region7: #{attn_block.3} parent=1 // loop_footer_branch
      %13 = sbr.rel target = $region3
    $region8: #{attn_block.3} parent=1 // loop_exit
      _
    %1071 = vsyncpa [#allocation6], 1
    %s1072 = scalar_lea.sflag [#allocation6], 1
    %1073 = vsyncpa %s1072, 1

// kernel: attn_block.2
$region0: #{attn_block.2}
  #allocation0 [shape = 'u32[]', space=smem, size = 0x4, offset = 0x4, fixed_abs, tag = 'smem constant byte address 0x4 - core index']
  #allocation1 [shape = 'u32[72,128]{1,0:T(1,128)}', space=vmem, size = 0x9000, scoped, tag = 'internal scratch']
  %s0 = inlined_call_operand.vmem [shape: f32[2,256,64], index: 0, kind: input, shape index: {}]
  %s1 = inlined_call_operand.vmem [shape: f32[1,64], index: 1, kind: input, shape index: {}]
  %s2 = inlined_call_operand.vmem [shape: f32[1,64], index: 2, kind: input, shape index: {}]
  %s3 = inlined_call_operand.hbm [shape: f32[64,32], index: 3, kind: input, shape index: {}]
  %s4 = inlined_call_operand.hbm [shape: f32[32,64], index: 4, kind: input, shape index: {}]
  %s5 = inlined_call_operand.vmem [shape: bf16[64,192], index: 5, kind: input, shape index: {}]
  %s6 = inlined_call_operand.vmem [shape: f32[1,192], index: 6, kind: input, shape index: {}]
  %s7 = inlined_call_operand.vmem [shape: bf16[2,256,64], index: 7, kind: output, shape index: {0}]
  %s8 = inlined_call_operand.vmem [shape: bf16[2,256,64], index: 8, kind: output, shape index: {1}]
  %s9 = inlined_call_operand.vmem [shape: bf16[2,256,64], index: 9, kind: output, shape index: {2}]
  %10 = xla_tuple %s7, %s8, %s9
  %s11 = sld [smem:[#allocation0]]
  $region85: #{attn_block.2} parent=0
    _
  %s13 = ssub.s32 1, %s11
  %s14 = scalar_select 0, %s13, %s11
  $region1: #{attn_block.2} parent=0
    #allocation2 [shape = 'u8[32768]{0}', space=vmem, size = 0x8000, scoped, tag = 'input window, operand 3, single buffered']
    #allocation3 [shape = 's32[2]{0}', space=sflag, size = 0x8, scoped, tag = 'scoped memory for attn_block.2']
    #allocation4 [shape = 'u8[16384]{0}', space=vmem, size = 0x4000, scoped, tag = 'input window, operand 4, single buffered']
    #allocation5 [shape = 's32[1]{0}', space=sflag, size = 0x4, scoped, tag = 'scoped memory for attn_block.2']
    %15 = vsyncpa [#allocation3], 0
    %16 = vsyncpa [#allocation5], 0
    loop: start=0, step=1, limit=4
    $region2: #{attn_block.2} parent=1 // loop_pre_header
      _
    $region3: #{attn_block.2} parent=1 // loop_header
      %s18 = sphi 0, %s22
      %p19 = scmp.ge.s32.totalorder %s18, 4
      %s28 = sphi 0, %s30
      %s31 = sphi 0, %s28
      %s32 = sphi 0, %s31
      %s48 = sphi 0, %s32
      %s52 = sphi 0, %s52
      %s54 = sphi 0, %s52
      %s55 = sphi 0, %s54
      %s69 = sphi 0, %s55
      %s73 = sphi 0, %s73
      %s75 = sphi 0, %s73
      %s76 = sphi 0, %s75
      %s90 = sphi 0, %s76
      %s94 = sphi 0, %s94
      %s96 = sphi 0, %s94
      %s97 = sphi 0, %s96
      %s111 = sphi 0, %s97
      %s115 = sphi 0, %s115
      %s117 = sphi 0, %s115
      %s118 = sphi 0, %s117
      %s132 = sphi 0, %s118
      %s136 = sphi 0, %s136
      %s138 = sphi 0, %s136
      %s139 = sphi 0, %s138
      %s153 = sphi 0, %s139
      %s157 = sphi 0, %s157
      %s159 = sphi 0, %s157
      %s160 = sphi 0, %s159
      %s174 = sphi 0, %s160
      %s180 = sphi 0, %s182
      %s183 = sphi 0, %s180
      %s184 = sphi 0, %s183
      %s200 = sphi 0, %s184
      %s206 = sphi 0, %s208
      %s209 = sphi 0, %s206
      %s210 = sphi 0, %s209
      %s226 = sphi 0, %s210
      %s232 = sphi 0, %s234
      %s235 = sphi 0, %s232
      %s236 = sphi 0, %s235
      %s252 = sphi 0, %s236
    $region4: #{attn_block.2} parent=1 // loop_header_branch
      %21 = sbr.rel (%p19) target = $region8
    $region5: #{attn_block.2} parent=1 // loop_body
      %s23 = ssub.s32 %s18, 1
      %s24 = ssub.s32 %s18, 2
      %s25 = sadd.s32 %s18, 1
      %s26 = ssub.s32 %s18, %s25
      %p27 = scmp.eq.s32.totalorder %s26, 0
      %s29 = sadd.s32 %s28, 1
      %s30 = scalar_select %p27, %s28, %s29
      %p33 = pneg %p27
      %p34 = scmp.eq.s32.totalorder %s18, 1
      %p35 = por %p33, %p34
      %p36 = scmp.ne.s32.totalorder %s28, %s31
      %p37 = scmp.eq.s32.totalorder %s18, 0
      %p38 = por %p36, %p37
      %p39 = scmp.ne.s32.totalorder %s28, %s31
      %p40 = scmp.eq.s32.totalorder %s23, 1
      %p41 = por %p39, %p40
      %p42 = scmp.ne.s32.totalorder %s31, %s32
      %p43 = scmp.eq.s32.totalorder %s23, 0
      %p44 = por %p42, %p43
      %p45 = scmp.ne.s32.totalorder %s31, %s32
      %p46 = scmp.eq.s32.totalorder %s24, 1
      %p47 = por %p45, %p46
      %p49 = scmp.ne.s32.totalorder %s32, %s48
      %p50 = scmp.eq.s32.totalorder %s24, 0
      %p51 = por %p49, %p50
      %s53 = sadd.s32 %s52, 1
      %p56 = scmp.eq.s32.totalorder %s18, 1
      %p57 = scmp.ne.s32.totalorder %s52, %s54
      %p58 = scmp.eq.s32.totalorder %s18, 0
      %p59 = por %p57, %p58
      %p60 = scmp.ne.s32.totalorder %s52, %s54
      %p61 = scmp.eq.s32.totalorder %s23, 1
      %p62 = por %p60, %p61
      %p63 = scmp.ne.s32.totalorder %s54, %s55
      %p64 = scmp.eq.s32.totalorder %s23, 0
      %p65 = por %p63, %p64
      %p66 = scmp.ne.s32.totalorder %s54, %s55
      %p67 = scmp.eq.s32.totalorder %s24, 1
      %p68 = por %p66, %p67
      %p70 = scmp.ne.s32.totalorder %s55, %s69
      %p71 = scmp.eq.s32.totalorder %s24, 0
      %p72 = por %p70, %p71
      %s74 = sadd.s32 %s73, 1
      %p77 = scmp.eq.s32.totalorder %s18, 1
      %p78 = scmp.ne.s32.totalorder %s73, %s75
      %p79 = scmp.eq.s32.totalorder %s18, 0
      %p80 = por %p78, %p79
      %p81 = scmp.ne.s32.totalorder %s73, %s75
      %p82 = scmp.eq.s32.totalorder %s23, 1
      %p83 = por %p81, %p82
      %p84 = scmp.ne.s32.totalorder %s75, %s76
      %p85 = scmp.eq.s32.totalorder %s23, 0
      %p86 = por %p84, %p85
      %p87 = scmp.ne.s32.totalorder %s75, %s76
      %p88 = scmp.eq.s32.totalorder %s24, 1
      %p89 = por %p87, %p88
      %p91 = scmp.ne.s32.totalorder %s76, %s90
      %p92 = scmp.eq.s32.totalorder %s24, 0
      %p93 = por %p91, %p92
      %s95 = sadd.s32 %s94, 1
      %p98 = scmp.eq.s32.totalorder %s18, 1
      %p99 = scmp.ne.s32.totalorder %s94, %s96
      %p100 = scmp.eq.s32.totalorder %s18, 0
      %p101 = por %p99, %p100
      %p102 = scmp.ne.s32.totalorder %s94, %s96
      %p103 = scmp.eq.s32.totalorder %s23, 1
      %p104 = por %p102, %p103
      %p105 = scmp.ne.s32.totalorder %s96, %s97
      %p106 = scmp.eq.s32.totalorder %s23, 0
      %p107 = por %p105, %p106
      %p108 = scmp.ne.s32.totalorder %s96, %s97
      %p109 = scmp.eq.s32.totalorder %s24, 1
      %p110 = por %p108, %p109
      %p112 = scmp.ne.s32.totalorder %s97, %s111
      %p113 = scmp.eq.s32.totalorder %s24, 0
      %p114 = por %p112, %p113
      %s116 = sadd.s32 %s115, 1
      %p119 = scmp.eq.s32.totalorder %s18, 1
      %p120 = scmp.ne.s32.totalorder %s115, %s117
      %p121 = scmp.eq.s32.totalorder %s18, 0
      %p122 = por %p120, %p121
      %p123 = scmp.ne.s32.totalorder %s115, %s117
      %p124 = scmp.eq.s32.totalorder %s23, 1
      %p125 = por %p123, %p124
      %p126 = scmp.ne.s32.totalorder %s117, %s118
      %p127 = scmp.eq.s32.totalorder %s23, 0
      %p128 = por %p126, %p127
      %p129 = scmp.ne.s32.totalorder %s117, %s118
      %p130 = scmp.eq.s32.totalorder %s24, 1
      %p131 = por %p129, %p130
      %p133 = scmp.ne.s32.totalorder %s118, %s132
      %p134 = scmp.eq.s32.totalorder %s24, 0
      %p135 = por %p133, %p134
      %s137 = sadd.s32 %s136, 1
      %p140 = scmp.eq.s32.totalorder %s18, 1
      %p141 = scmp.ne.s32.totalorder %s136, %s138
      %p142 = scmp.eq.s32.totalorder %s18, 0
      %p143 = por %p141, %p142
      %p144 = scmp.ne.s32.totalorder %s136, %s138
      %p145 = scmp.eq.s32.totalorder %s23, 1
      %p146 = por %p144, %p145
      %p147 = scmp.ne.s32.totalorder %s138, %s139
      %p148 = scmp.eq.s32.totalorder %s23, 0
      %p149 = por %p147, %p148
      %p150 = scmp.ne.s32.totalorder %s138, %s139
      %p151 = scmp.eq.s32.totalorder %s24, 1
      %p152 = por %p150, %p151
      %p154 = scmp.ne.s32.totalorder %s139, %s153
      %p155 = scmp.eq.s32.totalorder %s24, 0
      %p156 = por %p154, %p155
      %s158 = sadd.s32 %s157, 1
      %p161 = scmp.eq.s32.totalorder %s18, 1
      %p162 = scmp.ne.s32.totalorder %s157, %s159
      %p163 = scmp.eq.s32.totalorder %s18, 0
      %p164 = por %p162, %p163
      %p165 = scmp.ne.s32.totalorder %s157, %s159
      %p166 = scmp.eq.s32.totalorder %s23, 1
      %p167 = por %p165, %p166
      %p168 = scmp.ne.s32.totalorder %s159, %s160
      %p169 = scmp.eq.s32.totalorder %s23, 0
      %p170 = por %p168, %p169
      %p171 = scmp.ne.s32.totalorder %s159, %s160
      %p172 = scmp.eq.s32.totalorder %s24, 1
      %p173 = por %p171, %p172
      %p175 = scmp.ne.s32.totalorder %s160, %s174
      %p176 = scmp.eq.s32.totalorder %s24, 0
      %p177 = por %p175, %p176
      %s178 = ssub.s32 %s18, %s25
      %p179 = scmp.eq.s32.totalorder %s178, 0
      %s181 = sadd.s32 %s180, 1
      %s182 = scalar_select %p179, %s180, %s181
      %p185 = pneg %p179
      %p186 = scmp.eq.s32.totalorder %s18, 1
      %p187 = por %p185, %p186
      %p188 = scmp.ne.s32.totalorder %s180, %s183
      %p189 = scmp.eq.s32.totalorder %s18, 0
      %p190 = por %p188, %p189
      %p191 = scmp.ne.s32.totalorder %s180, %s183
      %p192 = scmp.eq.s32.totalorder %s23, 1
      %p193 = por %p191, %p192
      %p194 = scmp.ne.s32.totalorder %s183, %s184
      %p195 = scmp.eq.s32.totalorder %s23, 0
      %p196 = por %p194, %p195
      %p197 = scmp.ne.s32.totalorder %s183, %s184
      %p198 = scmp.eq.s32.totalorder %s24, 1
      %p199 = por %p197, %p198
      %p201 = scmp.ne.s32.totalorder %s184, %s200
      %p202 = scmp.eq.s32.totalorder %s24, 0
      %p203 = por %p201, %p202
      %s204 = ssub.s32 %s18, %s25
      %p205 = scmp.eq.s32.totalorder %s204, 0
      %s207 = sadd.s32 %s206, 1
      %s208 = scalar_select %p205, %s206, %s207
      %p211 = pneg %p205
      %p212 = scmp.eq.s32.totalorder %s18, 1
      %p213 = por %p211, %p212
      %p214 = scmp.ne.s32.totalorder %s206, %s209
      %p215 = scmp.eq.s32.totalorder %s18, 0
      %p216 = por %p214, %p215
      %p217 = scmp.ne.s32.totalorder %s206, %s209
      %p218 = scmp.eq.s32.totalorder %s23, 1
      %p219 = por %p217, %p218
      %p220 = scmp.ne.s32.totalorder %s209, %s210
      %p221 = scmp.eq.s32.totalorder %s23, 0
      %p222 = por %p220, %p221
      %p223 = scmp.ne.s32.totalorder %s209, %s210
      %p224 = scmp.eq.s32.totalorder %s24, 1
      %p225 = por %p223, %p224
      %p227 = scmp.ne.s32.totalorder %s210, %s226
      %p228 = scmp.eq.s32.totalorder %s24, 0
      %p229 = por %p227, %p228
      %s230 = ssub.s32 %s18, %s25
      %p231 = scmp.eq.s32.totalorder %s230, 0
      %s233 = sadd.s32 %s232, 1
      %s234 = scalar_select %p231, %s232, %s233
      %p237 = pneg %p231
      %p238 = scmp.eq.s32.totalorder %s18, 1
      %p239 = por %p237, %p238
      %p240 = scmp.ne.s32.totalorder %s232, %s235
      %p241 = scmp.eq.s32.totalorder %s18, 0
      %p242 = por %p240, %p241
      %p243 = scmp.ne.s32.totalorder %s232, %s235
      %p244 = scmp.eq.s32.totalorder %s23, 1
      %p245 = por %p243, %p244
      %p246 = scmp.ne.s32.totalorder %s235, %s236
      %p247 = scmp.eq.s32.totalorder %s23, 0
      %p248 = por %p246, %p247
      %p249 = scmp.ne.s32.totalorder %s235, %s236
      %p250 = scmp.eq.s32.totalorder %s24, 1
      %p251 = por %p249, %p250
      %p253 = scmp.ne.s32.totalorder %s236, %s252
      %p254 = scmp.eq.s32.totalorder %s24, 0
      %p255 = por %p253, %p254
      %p256 = scmp.le.s32.totalorder 1, %s18
      %p257 = scmp.lt.s32.totalorder %s18, 3
      %p258 = pnand %p256, %p257
      %p259 = pneg %p258
      // Predicated region
      $region9: #{attn_block.2} parent=5 // pred_check
        _
      $region10: #{attn_block.2} parent=5 // pred_check_branch
        %261 = sbr.rel (%p258) target = $region12
      $region11: #{attn_block.2} parent=5 // pred_region
        %s262 = ssub.s32 %s18, 1
        // Predicated region
        $region13: #{attn_block.2} parent=11 // pred_check
          %p263 = pneg %p65
        $region14: #{attn_block.2} parent=11 // pred_check_branch
          %265 = sbr.rel (%p263) target = $region16
        $region15: #{attn_block.2} parent=11 // pred_region
          _
        $region16: #{attn_block.2} parent=11 // pred_fallthru
          _
        // Predicated region
        $region17: #{attn_block.2} parent=11 // pred_check
          %p266 = pneg %p86
        $region18: #{attn_block.2} parent=11 // pred_check_branch
          %268 = sbr.rel (%p266) target = $region20
        $region19: #{attn_block.2} parent=11 // pred_region
          _
        $region20: #{attn_block.2} parent=11 // pred_fallthru
          _
        // Predicated region
        $region21: #{attn_block.2} parent=11 // pred_check
          %p269 = pneg %p107
        $region22: #{attn_block.2} parent=11 // pred_check_branch
          %271 = sbr.rel (%p269) target = $region24
        $region23: #{attn_block.2} parent=11 // pred_region
          %273 = vsyncadd [#allocation3], 0
          %s274 = sshll.u32 %s3, 4
          %s275 = int_to_ptr.hbm [resolvable:$true] %s274
          %s276 = sshll.u32 [#allocation2], 4
          %s277 = int_to_ptr.vmem [resolvable:$true] %s276
          %282 = dma.hbm_to_vmem [thread:$0]  %s275, 1024, %s277, [#allocation3], 128, 128, 8
        $region24: #{attn_block.2} parent=11 // pred_fallthru
          _
        // Predicated region
        $region25: #{attn_block.2} parent=11 // pred_check
          %p283 = pneg %p128
        $region26: #{attn_block.2} parent=11 // pred_check_branch
          %285 = sbr.rel (%p283) target = $region28
        $region27: #{attn_block.2} parent=11 // pred_region
          %287 = vsyncadd [#allocation5], 0
          %s288 = sshll.u32 %s4, 4
          %s289 = int_to_ptr.hbm [resolvable:$true] %s288
          %s290 = sshll.u32 [#allocation4], 4
          %s291 = int_to_ptr.vmem [resolvable:$true] %s290
          %296 = dma.hbm_to_vmem [thread:$0]  %s289, 512, %s291, [#allocation5], 128, 128, 8
        $region28: #{attn_block.2} parent=11 // pred_fallthru
          _
        // Predicated region
        $region29: #{attn_block.2} parent=11 // pred_check
          %p297 = pneg %p149
        $region30: #{attn_block.2} parent=11 // pred_check_branch
          %299 = sbr.rel (%p297) target = $region32
        $region31: #{attn_block.2} parent=11 // pred_region
          _
        $region32: #{attn_block.2} parent=11 // pred_fallthru
          _
        // Predicated region
        $region33: #{attn_block.2} parent=11 // pred_check
          %p300 = pneg %p170
        $region34: #{attn_block.2} parent=11 // pred_check_branch
          %302 = sbr.rel (%p300) target = $region36
        $region35: #{attn_block.2} parent=11 // pred_region
          _
        $region36: #{attn_block.2} parent=11 // pred_fallthru
          _
      $region12: #{attn_block.2} parent=5 // pred_fallthru
        _
      %p303 = scmp.lt.s32.totalorder %s18, 2
      // Predicated region
      $region37: #{attn_block.2} parent=5 // pred_check
        %p304 = pneg %p303
      $region38: #{attn_block.2} parent=5 // pred_check_branch
        %306 = sbr.rel (%p304) target = $region40
      $region39: #{attn_block.2} parent=5 // pred_region
        // Predicated region
        $region41: #{attn_block.2} parent=39 // pred_check
          %p307 = pneg %p38
        $region42: #{attn_block.2} parent=39 // pred_check_branch
          %309 = sbr.rel (%p307) target = $region44
        $region43: #{attn_block.2} parent=39 // pred_region
          %p310 = scmp.lt.s32.totalorder %s18, 1
          %s311 = scalar_select %p310, %s18, 1
          %s312 = smul.addr %s311, 32
          %s313 = smul.addr %s312, 8
          %s314 = scalar_lea.vmem %s0, %s313
        $region44: #{attn_block.2} parent=39 // pred_fallthru
          _
      $region40: #{attn_block.2} parent=5 // pred_fallthru
        _
      %p315 = scmp.le.s32.totalorder 1, %s18
      %p316 = scmp.lt.s32.totalorder %s18, 3
      %p317 = pnand %p315, %p316
      %p318 = pneg %p317
      // Predicated region
      $region45: #{attn_block.2} parent=5 // pred_check
        _
      $region46: #{attn_block.2} parent=5 // pred_check_branch
        %320 = sbr.rel (%p317) target = $region48
      $region47: #{attn_block.2} parent=5 // pred_region
        %s321 = ssub.s32 %s18, 1
        // Predicated region
        $region49: #{attn_block.2} parent=47 // pred_check
          %p322 = pneg %p107
        $region50: #{attn_block.2} parent=47 // pred_check_branch
          %324 = sbr.rel (%p322) target = $region52
        $region51: #{attn_block.2} parent=47 // pred_region
          %326 = dma.done [#allocation3], 1024
        $region52: #{attn_block.2} parent=47 // pred_fallthru
          _
        // Predicated region
        $region53: #{attn_block.2} parent=47 // pred_check
          %p327 = pneg %p128
        $region54: #{attn_block.2} parent=47 // pred_check_branch
          %329 = sbr.rel (%p327) target = $region56
        $region55: #{attn_block.2} parent=47 // pred_region
          %331 = dma.done [#allocation5], 512
        $region56: #{attn_block.2} parent=47 // pred_fallthru
          _
        %p332 = scmp.lt.s32.totalorder %s23, 1
        %s333 = scalar_select %p332, %s23, 1
        %s334 = smul.addr %s333, 32
        %s335 = smul.addr %s334, 8
        %s336 = scalar_lea.vmem %s0, %s335
        %p337 = pneg %p44
        %p338 = pneg %p41
        %p339 = pneg %p65
        %p340 = pneg %p62
        %p341 = pneg %p86
        %p342 = pneg %p83
        %p343 = pneg %p107
        %p344 = pneg %p104
        %p345 = pneg %p128
        %p346 = pneg %p125
        %p347 = pneg %p149
        %p348 = pneg %p146
        %p349 = pneg %p170
        %p350 = pneg %p167
        %p351 = pneg %p196
        %p352 = pneg %p193
        %p353 = scmp.lt.s32.totalorder %s23, 1
        %s354 = scalar_select %p353, %s23, 1
        %s355 = smul.addr %s354, 32
        %s356 = smul.addr %s355, 4
        %s357 = scalar_lea.vmem %s7, %s356
        %p358 = pneg %p222
        %p359 = pneg %p219
        %p360 = scmp.lt.s32.totalorder %s23, 1
        %s361 = scalar_select %p360, %s23, 1
        %s362 = smul.addr %s361, 32
        %s363 = smul.addr %s362, 4
        %s364 = scalar_lea.vmem %s8, %s363
        %p365 = pneg %p248
        %p366 = pneg %p245
        %p367 = scmp.lt.s32.totalorder %s23, 1
        %s368 = scalar_select %p367, %s23, 1
        %s369 = smul.addr %s368, 32
        %s370 = smul.addr %s369, 4
        %s371 = scalar_lea.vmem %s9, %s370
        %p372 = scmp.lt.s32.totalorder %s23, 1
        %s373 = scalar_select %p372, %s23, 1
        %s374 = smul.addr %s373, 32
        %s375 = smul.addr %s374, 8
        %s376 = scalar_lea.vmem %s0, %s375
        %p377 = scmp.lt.s32.totalorder %s23, 1
        %s378 = scalar_select %p377, %s23, 1
        %s379 = smul.addr %s378, 32
        %s380 = smul.addr %s379, 4
        %s381 = scalar_lea.vmem %s7, %s380
        %p382 = scmp.lt.s32.totalorder %s23, 1
        %s383 = scalar_select %p382, %s23, 1
        %s384 = smul.addr %s383, 32
        %s385 = smul.addr %s384, 4
        %s386 = scalar_lea.vmem %s8, %s385
        %p387 = scmp.lt.s32.totalorder %s23, 1
        %s388 = scalar_select %p387, %s23, 1
        %s389 = smul.addr %s388, 32
        %s390 = smul.addr %s389, 4
        %s391 = scalar_lea.vmem %s9, %s390
        %v393 = vld [vmem:[%s376] sm:$0xff]
        %v394 = vld [vmem:[%s376 + $0x8] sm:$0xff]
        %v395 = vld [vmem:[%s376 + $0x10] sm:$0xff]
        %v396 = vld [vmem:[%s376 + $0x18] sm:$0xff]
        %v397 = vld [vmem:[%s376 + $0x20] sm:$0xff]
        %v398 = vld [vmem:[%s376 + $0x28] sm:$0xff]
        %v399 = vld [vmem:[%s376 + $0x30] sm:$0xff]
        %v400 = vld [vmem:[%s376 + $0x38] sm:$0xff]
        %v401 = vld [vmem:[%s376 + $0x40] sm:$0xff]
        %v402 = vld [vmem:[%s376 + $0x48] sm:$0xff]
        %v403 = vld [vmem:[%s376 + $0x50] sm:$0xff]
        %v404 = vld [vmem:[%s376 + $0x58] sm:$0xff]
        %v405 = vld [vmem:[%s376 + $0x60] sm:$0xff]
        %v406 = vld [vmem:[%s376 + $0x68] sm:$0xff]
        %v407 = vld [vmem:[%s376 + $0x70] sm:$0xff]
        %v408 = vld [vmem:[%s376 + $0x78] sm:$0xff]
        %v409 = vld [vmem:[%s376 + $0x80] sm:$0xff]
        %v410 = vld [vmem:[%s376 + $0x88] sm:$0xff]
        %v411 = vld [vmem:[%s376 + $0x90] sm:$0xff]
        %v412 = vld [vmem:[%s376 + $0x98] sm:$0xff]
        %v413 = vld [vmem:[%s376 + $0xa0] sm:$0xff]
        %v414 = vld [vmem:[%s376 + $0xa8] sm:$0xff]
        %v415 = vld [vmem:[%s376 + $0xb0] sm:$0xff]
        %v416 = vld [vmem:[%s376 + $0xb8] sm:$0xff]
        %v417 = vld [vmem:[%s376 + $0xc0] sm:$0xff]
        %v418 = vld [vmem:[%s376 + $0xc8] sm:$0xff]
        %v419 = vld [vmem:[%s376 + $0xd0] sm:$0xff]
        %v420 = vld [vmem:[%s376 + $0xd8] sm:$0xff]
        %v421 = vld [vmem:[%s376 + $0xe0] sm:$0xff]
        %v422 = vld [vmem:[%s376 + $0xe8] sm:$0xff]
        %v423 = vld [vmem:[%s376 + $0xf0] sm:$0xff]
        %v424 = vld [vmem:[%s376 + $0xf8] sm:$0xff]
        %vm425 = vcmask 523264
        %v426 = vsel %vm425, %v393, 0.0
        %v427 = vsel %vm425, %v394, 0.0
        %v428 = vadd.f32 %v426, %v427
        %v429 = vsel %vm425, %v395, 0.0
        %v430 = vadd.f32 %v428, %v429
        %v431 = vsel %vm425, %v396, 0.0
        %v432 = vadd.f32 %v430, %v431
        %v433 = vsel %vm425, %v397, 0.0
        %v434 = vadd.f32 %v432, %v433
        %v435 = vsel %vm425, %v398, 0.0
        %v436 = vadd.f32 %v434, %v435
        %v437 = vsel %vm425, %v399, 0.0
        %v438 = vadd.f32 %v436, %v437
        %v439 = vsel %vm425, %v400, 0.0
        %v440 = vadd.f32 %v438, %v439
        %v441 = vsel %vm425, %v401, 0.0
        %v442 = vadd.f32 %v440, %v441
        %v443 = vsel %vm425, %v402, 0.0
        %v444 = vadd.f32 %v442, %v443
        %v445 = vsel %vm425, %v403, 0.0
        %v446 = vadd.f32 %v444, %v445
        %v447 = vsel %vm425, %v404, 0.0
        %v448 = vadd.f32 %v446, %v447
        %v449 = vsel %vm425, %v405, 0.0
        %v450 = vadd.f32 %v448, %v449
        %v451 = vsel %vm425, %v406, 0.0
        %v452 = vadd.f32 %v450, %v451
        %v453 = vsel %vm425, %v407, 0.0
        %v454 = vadd.f32 %v452, %v453
        %v455 = vsel %vm425, %v408, 0.0
        %v456 = vadd.f32 %v454, %v455
        %v457 = vsel %vm425, %v409, 0.0
        %v458 = vadd.f32 %v456, %v457
        %v459 = vsel %vm425, %v410, 0.0
        %v460 = vadd.f32 %v458, %v459
        %v461 = vsel %vm425, %v411, 0.0
        %v462 = vadd.f32 %v460, %v461
        %v463 = vsel %vm425, %v412, 0.0
        %v464 = vadd.f32 %v462, %v463
        %v465 = vsel %vm425, %v413, 0.0
        %v466 = vadd.f32 %v464, %v465
        %v467 = vsel %vm425, %v414, 0.0
        %v468 = vadd.f32 %v466, %v467
        %v469 = vsel %vm425, %v415, 0.0
        %v470 = vadd.f32 %v468, %v469
        %v471 = vsel %vm425, %v416, 0.0
        %v472 = vadd.f32 %v470, %v471
        %v473 = vsel %vm425, %v417, 0.0
        %v474 = vadd.f32 %v472, %v473
        %v475 = vsel %vm425, %v418, 0.0
        %v476 = vadd.f32 %v474, %v475
        %v477 = vsel %vm425, %v419, 0.0
        %v478 = vadd.f32 %v476, %v477
        %v479 = vsel %vm425, %v420, 0.0
        %v480 = vadd.f32 %v478, %v479
        %v481 = vsel %vm425, %v421, 0.0
        %v482 = vadd.f32 %v480, %v481
        %v483 = vsel %vm425, %v422, 0.0
        %v484 = vadd.f32 %v482, %v483
        %v485 = vsel %vm425, %v423, 0.0
        %v486 = vadd.f32 %v484, %v485
        %v487 = vsel %vm425, %v424, 0.0
        %v488 = vadd.f32 %v486, %v487
        %v489 = vrot.slane %v488, 4
        %v490 = vadd.f32 %v488, %v489
        %v491 = vrot.slane %v490, 2
        %v492 = vadd.f32 %v490, %v491
        %v493 = vrot.slane %v492, 1
        %v494 = vadd.f32 %v492, %v493
        %v495 = vmul.f32 %v494, 0.00390625
        %v496 = vmul.f32 %v393, %v393
        %v497 = vmul.f32 %v394, %v394
        %v498 = vmul.f32 %v395, %v395
        %v499 = vmul.f32 %v396, %v396
        %v500 = vmul.f32 %v397, %v397
        %v501 = vmul.f32 %v398, %v398
        %v502 = vmul.f32 %v399, %v399
        %v503 = vmul.f32 %v400, %v400
        %v504 = vmul.f32 %v401, %v401
        %v505 = vmul.f32 %v402, %v402
        %v506 = vmul.f32 %v403, %v403
        %v507 = vmul.f32 %v404, %v404
        %v508 = vmul.f32 %v405, %v405
        %v509 = vmul.f32 %v406, %v406
        %v510 = vmul.f32 %v407, %v407
        %v511 = vmul.f32 %v408, %v408
        %v512 = vmul.f32 %v409, %v409
        %v513 = vmul.f32 %v410, %v410
        %v514 = vmul.f32 %v411, %v411
        %v515 = vmul.f32 %v412, %v412
        %v516 = vmul.f32 %v413, %v413
        %v517 = vmul.f32 %v414, %v414
        %v518 = vmul.f32 %v415, %v415
        %v519 = vmul.f32 %v416, %v416
        %v520 = vmul.f32 %v417, %v417
        %v521 = vmul.f32 %v418, %v418
        %v522 = vmul.f32 %v419, %v419
        %v523 = vmul.f32 %v420, %v420
        %v524 = vmul.f32 %v421, %v421
        %v525 = vmul.f32 %v422, %v422
        %v526 = vmul.f32 %v423, %v423
        %v527 = vmul.f32 %v424, %v424
        %v528 = vsel %vm425, %v496, 0.0
        %v529 = vsel %vm425, %v497, 0.0
        %v530 = vadd.f32 %v528, %v529
        %v531 = vsel %vm425, %v498, 0.0
        %v532 = vadd.f32 %v530, %v531
        %v533 = vsel %vm425, %v499, 0.0
        %v534 = vadd.f32 %v532, %v533
        %v535 = vsel %vm425, %v500, 0.0
        %v536 = vadd.f32 %v534, %v535
        %v537 = vsel %vm425, %v501, 0.0
        %v538 = vadd.f32 %v536, %v537
        %v539 = vsel %vm425, %v502, 0.0
        %v540 = vadd.f32 %v538, %v539
        %v541 = vsel %vm425, %v503, 0.0
        %v542 = vadd.f32 %v540, %v541
        %v543 = vsel %vm425, %v504, 0.0
        %v544 = vadd.f32 %v542, %v543
        %v545 = vsel %vm425, %v505, 0.0
        %v546 = vadd.f32 %v544, %v545
        %v547 = vsel %vm425, %v506, 0.0
        %v548 = vadd.f32 %v546, %v547
        %v549 = vsel %vm425, %v507, 0.0
        %v550 = vadd.f32 %v548, %v549
        %v551 = vsel %vm425, %v508, 0.0
        %v552 = vadd.f32 %v550, %v551
        %v553 = vsel %vm425, %v509, 0.0
        %v554 = vadd.f32 %v552, %v553
        %v555 = vsel %vm425, %v510, 0.0
        %v556 = vadd.f32 %v554, %v555
        %v557 = vsel %vm425, %v511, 0.0
        %v558 = vadd.f32 %v556, %v557
        %v559 = vsel %vm425, %v512, 0.0
        %v560 = vadd.f32 %v558, %v559
        %v561 = vsel %vm425, %v513, 0.0
        %v562 = vadd.f32 %v560, %v561
        %v563 = vsel %vm425, %v514, 0.0
        %v564 = vadd.f32 %v562, %v563
        %v565 = vsel %vm425, %v515, 0.0
        %v566 = vadd.f32 %v564, %v565
        %v567 = vsel %vm425, %v516, 0.0
        %v568 = vadd.f32 %v566, %v567
        %v569 = vsel %vm425, %v517, 0.0
        %v570 = vadd.f32 %v568, %v569
        %v571 = vsel %vm425, %v518, 0.0
        %v572 = vadd.f32 %v570, %v571
        %v573 = vsel %vm425, %v519, 0.0
        %v574 = vadd.f32 %v572, %v573
        %v575 = vsel %vm425, %v520, 0.0
        %v576 = vadd.f32 %v574, %v575
        %v577 = vsel %vm425, %v521, 0.0
        %v578 = vadd.f32 %v576, %v577
        %v579 = vsel %vm425, %v522, 0.0
        %v580 = vadd.f32 %v578, %v579
        %v581 = vsel %vm425, %v523, 0.0
        %v582 = vadd.f32 %v580, %v581
        %v583 = vsel %vm425, %v524, 0.0
        %v584 = vadd.f32 %v582, %v583
        %v585 = vsel %vm425, %v525, 0.0
        %v586 = vadd.f32 %v584, %v585
        %v587 = vsel %vm425, %v526, 0.0
        %v588 = vadd.f32 %v586, %v587
        %v589 = vsel %vm425, %v527, 0.0
        %v590 = vadd.f32 %v588, %v589
        %v591 = vrot.slane %v590, 4
        %v592 = vadd.f32 %v590, %v591
        %v593 = vrot.slane %v592, 2
        %v594 = vadd.f32 %v592, %v593
        %v595 = vrot.slane %v594, 1
        %v596 = vadd.f32 %v594, %v595
        %v597 = vmul.f32 %v596, 0.00390625
        %v598 = vld [vmem:[#allocation2] sm:$0xff]
        %v599 = vld [vmem:[#allocation2 + $0x8] sm:$0xff]
        %v600 = vld [vmem:[#allocation2 + $0x10] sm:$0xff]
        %v601 = vld [vmem:[#allocation2 + $0x18] sm:$0xff]
        %v602 = vld [vmem:[#allocation2 + $0x20] sm:$0xff]
        %v603 = vld [vmem:[#allocation2 + $0x28] sm:$0xff]
        %v604 = vld [vmem:[#allocation2 + $0x30] sm:$0xff]
        %v605 = vld [vmem:[#allocation2 + $0x38] sm:$0xff]
        %v607 = vsel %vm425, %v495, 0
        %609 = vmatpush.msra.mxu0 0.0
        %610 = vmatpush.msra.mxu0 0.0
        %611 = vmatpush.msra.mxu0 0.0
        %612 = vmatpush.msra.mxu0 0.0
        %613 = vmatpush.msra.mxu0 0.0
        %614 = vmatpush.msra.mxu0 0.0
        %615 = vmatpush.msra.mxu0 0.0
        %616 = vmatpush.msra.mxu0 0.0
        %617 = vmatpush.msra.mxu0 %v605
        %618 = vmatpush.msra.mxu0 %v604
        %619 = vmatpush.msra.mxu0 %v603
        %620 = vmatpush.msra.mxu0 %v602
        %621 = vmatpush.msra.mxu0 %v601
        %622 = vmatpush.msra.mxu0 %v600
        %623 = vmatpush.msra.mxu0 %v599
        %624 = vmatpush.msra.mxu0 %v598
        %625 = vmatmul.f32.gmra.mxu0 %v607
        %v626 = vpop.f32.mrf.mxu0
        %v627 = vadd.f32 0.0, %v626
        %628 = vdwg.mxu0
        %v630 = vsel %vm425, %v597, 0
        %632 = vmatpush.msra.mxu0 0.0
        %633 = vmatpush.msra.mxu0 0.0
        %634 = vmatpush.msra.mxu0 0.0
        %635 = vmatpush.msra.mxu0 0.0
        %636 = vmatpush.msra.mxu0 0.0
        %637 = vmatpush.msra.mxu0 0.0
        %638 = vmatpush.msra.mxu0 0.0
        %639 = vmatpush.msra.mxu0 0.0
        %640 = vmatpush.msra.mxu0 %v605
        %641 = vmatpush.msra.mxu0 %v604
        %642 = vmatpush.msra.mxu0 %v603
        %643 = vmatpush.msra.mxu0 %v602
        %644 = vmatpush.msra.mxu0 %v601
        %645 = vmatpush.msra.mxu0 %v600
        %646 = vmatpush.msra.mxu0 %v599
        %647 = vmatpush.msra.mxu0 %v598
        %648 = vmatmul.f32.gmra.mxu0 %v630
        %v649 = vpop.f32.mrf.mxu0
        %v650 = vadd.f32 0.0, %v649
        %651 = vdwg.mxu0
        %v652 = vld [vmem:[#allocation4] sm:$0xff]
        %v653 = vld [vmem:[#allocation4 + $0x8] sm:$0xff]
        %v654 = vld [vmem:[#allocation4 + $0x10] sm:$0xff]
        %v655 = vld [vmem:[#allocation4 + $0x18] sm:$0xff]
        %vm656 = vcmask 261120
        %v658 = vsel %vm656, %v627, 0
        %660 = vmatpush.msra.mxu0 0.0
        %661 = vmatpush.msra.mxu0 0.0
        %662 = vmatpush.msra.mxu0 0.0
        %663 = vmatpush.msra.mxu0 0.0
        %664 = vmatpush.msra.mxu0 0.0
        %665 = vmatpush.msra.mxu0 0.0
        %666 = vmatpush.msra.mxu0 0.0
        %667 = vmatpush.msra.mxu0 0.0
        %668 = vmatpush.msra.mxu0 0.0
        %669 = vmatpush.msra.mxu0 0.0
        %670 = vmatpush.msra.mxu0 0.0
        %671 = vmatpush.msra.mxu0 0.0
        %672 = vmatpush.msra.mxu0 %v655
        %673 = vmatpush.msra.mxu0 %v654
        %674 = vmatpush.msra.mxu0 %v653
        %675 = vmatpush.msra.mxu0 %v652
        %676 = vmatmul.f32.gmra.mxu0 %v658
        %v677 = vpop.f32.mrf.mxu0
        %v678 = vadd.f32 0.0, %v677
        %679 = vdwg.mxu0
        %v681 = vsel %vm656, %v650, 0
        %683 = vmatpush.msra.mxu0 0.0
        %684 = vmatpush.msra.mxu0 0.0
        %685 = vmatpush.msra.mxu0 0.0
        %686 = vmatpush.msra.mxu0 0.0
        %687 = vmatpush.msra.mxu0 0.0
        %688 = vmatpush.msra.mxu0 0.0
        %689 = vmatpush.msra.mxu0 0.0
        %690 = vmatpush.msra.mxu0 0.0
        %691 = vmatpush.msra.mxu0 0.0
        %692 = vmatpush.msra.mxu0 0.0
        %693 = vmatpush.msra.mxu0 0.0
        %694 = vmatpush.msra.mxu0 0.0
        %695 = vmatpush.msra.mxu0 %v655
        %696 = vmatpush.msra.mxu0 %v654
        %697 = vmatpush.msra.mxu0 %v653
        %698 = vmatpush.msra.mxu0 %v652
        %699 = vmatmul.f32.gmra.mxu0 %v681
        %v700 = vpop.f32.mrf.mxu0
        %v701 = vadd.f32 0.0, %v700
        %702 = vdwg.mxu0
        %v703 = vmul.f32 %v678, %v678
        %v704 = vsub.f32 %v701, %v703
        %v705 = vmax.f32 %v704, 0.0
        %v706 = vadd.f32 %v705, 1e-06
        %v707 = vrsqrt.pop %v706
        %v708 = vmul.f32 %v707, %v706
        %v709 = vmul.f32 %v708, %v707
        %v710 = vmul.f32 0.5, %v709
        %v711 = vsub.f32 1.5, %v710
        %v712 = vmul.f32 %v707, %v711
        %vm713 = vweird.f32 %v706
        %vm714 = vweird.f32 %v707
        %vm715 = vmor %vm713, %vm714
        %v716 = vsel %vm715, %v707, %v712
        %v717 = vld [vmem:[%s1] sm:$0x1]
        %v718 = vmul.f32 %v716, %v717
        %v719 = vld [vmem:[%s2] sm:$0x1]
        %v720 = vmul.f32 %v678, %v718
        %v721 = vsub.f32 %v719, %v720
        %v722 = vperm.slane %v718, 0
        %v723 = vmul.f32 %v393, %v722
        %v724 = vmul.f32 %v394, %v722
        %v725 = vmul.f32 %v395, %v722
        %v726 = vmul.f32 %v396, %v722
        %v727 = vmul.f32 %v397, %v722
        %v728 = vmul.f32 %v398, %v722
        %v729 = vmul.f32 %v399, %v722
        %v730 = vmul.f32 %v400, %v722
        %v731 = vmul.f32 %v401, %v722
        %v732 = vmul.f32 %v402, %v722
        %v733 = vmul.f32 %v403, %v722
        %v734 = vmul.f32 %v404, %v722
        %v735 = vmul.f32 %v405, %v722
        %v736 = vmul.f32 %v406, %v722
        %v737 = vmul.f32 %v407, %v722
        %v738 = vmul.f32 %v408, %v722
        %v739 = vmul.f32 %v409, %v722
        %v740 = vmul.f32 %v410, %v722
        %v741 = vmul.f32 %v411, %v722
        %v742 = vmul.f32 %v412, %v722
        %v743 = vmul.f32 %v413, %v722
        %v744 = vmul.f32 %v414, %v722
        %v745 = vmul.f32 %v415, %v722
        %v746 = vmul.f32 %v416, %v722
        %v747 = vmul.f32 %v417, %v722
        %v748 = vmul.f32 %v418, %v722
        %v749 = vmul.f32 %v419, %v722
        %v750 = vmul.f32 %v420, %v722
        %v751 = vmul.f32 %v421, %v722
        %v752 = vmul.f32 %v422, %v722
        %v753 = vmul.f32 %v423, %v722
        %v754 = vmul.f32 %v424, %v722
        %v756 = vperm.slane %v721, 0
        %v758 = vadd.f32 %v723, %v756
        %v759 = vadd.f32 %v724, %v756
        %v760 = vadd.f32 %v725, %v756
        %v761 = vadd.f32 %v726, %v756
        %v762 = vadd.f32 %v727, %v756
        %v763 = vadd.f32 %v728, %v756
        %v764 = vadd.f32 %v729, %v756
        %v765 = vadd.f32 %v730, %v756
        %v766 = vadd.f32 %v731, %v756
        %v767 = vadd.f32 %v732, %v756
        %v768 = vadd.f32 %v733, %v756
        %v769 = vadd.f32 %v734, %v756
        %v770 = vadd.f32 %v735, %v756
        %v771 = vadd.f32 %v736, %v756
        %v772 = vadd.f32 %v737, %v756
        %v773 = vadd.f32 %v738, %v756
        %v774 = vadd.f32 %v739, %v756
        %v775 = vadd.f32 %v740, %v756
        %v776 = vadd.f32 %v741, %v756
        %v777 = vadd.f32 %v742, %v756
        %v778 = vadd.f32 %v743, %v756
        %v779 = vadd.f32 %v744, %v756
        %v780 = vadd.f32 %v745, %v756
        %v781 = vadd.f32 %v746, %v756
        %v782 = vadd.f32 %v747, %v756
        %v783 = vadd.f32 %v748, %v756
        %v784 = vadd.f32 %v749, %v756
        %v785 = vadd.f32 %v750, %v756
        %v786 = vadd.f32 %v751, %v756
        %v787 = vadd.f32 %v752, %v756
        %v788 = vadd.f32 %v753, %v756
        %v789 = vadd.f32 %v754, %v756
        %v790 = vpack.c.bf16 %v759, %v758
        %v791 = vpack.c.bf16 %v761, %v760
        %v792 = vpack.c.bf16 %v763, %v762
        %v793 = vpack.c.bf16 %v765, %v764
        %v794 = vpack.c.bf16 %v767, %v766
        %v795 = vpack.c.bf16 %v769, %v768
        %v796 = vpack.c.bf16 %v771, %v770
        %v797 = vpack.c.bf16 %v773, %v772
        %v798 = vpack.c.bf16 %v775, %v774
        %v799 = vpack.c.bf16 %v777, %v776
        %v800 = vpack.c.bf16 %v779, %v778
        %v801 = vpack.c.bf16 %v781, %v780
        %v802 = vpack.c.bf16 %v783, %v782
        %v803 = vpack.c.bf16 %v785, %v784
        %v804 = vpack.c.bf16 %v787, %v786
        %v805 = vpack.c.bf16 %v789, %v788
        %v806 = vld [vmem:[%s5] sm:$0xff]
        %v807 = vld [vmem:[%s5 + $0x8] sm:$0xff]
        %v808 = vld [vmem:[%s5 + $0x10] sm:$0xff]
        %v809 = vld [vmem:[%s5 + $0x18] sm:$0xff]
        %v810 = vld [vmem:[%s5 + $0x20] sm:$0xff]
        %v811 = vld [vmem:[%s5 + $0x28] sm:$0xff]
        %v812 = vld [vmem:[%s5 + $0x30] sm:$0xff]
        %v813 = vld [vmem:[%s5 + $0x38] sm:$0xff]
        %v814 = vld [vmem:[%s6] sm:$0x3]
        %v816 = vperm.slane %v814, 0
        %v817 = vperm.slane %v814, 1
        %v828 = vunpack.c.l.b16 %v806
        %v829 = vunpack.c.h.b16 %v806
        %v830 = vunpack.c.l.b16 %v807
        %v831 = vunpack.c.h.b16 %v807
        %v832 = vunpack.c.l.b16 %v808
        %v833 = vunpack.c.h.b16 %v808
        %v834 = vunpack.c.l.b16 %v809
        %v835 = vunpack.c.h.b16 %v809
        %v836 = vunpack.c.l.b16 %v810
        %v837 = vunpack.c.h.b16 %v810
        %v838 = vunpack.c.l.b16 %v811
        %v839 = vunpack.c.h.b16 %v811
        %v840 = vunpack.c.l.b16 %v812
        %v841 = vunpack.c.h.b16 %v812
        %v842 = vunpack.c.l.b16 %v813
        %v843 = vunpack.c.h.b16 %v813
        %v844 = vpack.c.b16 %v830, %v828
        %v845 = vpack.c.b16 %v831, %v829
        %v846 = vpack.c.b16 %v834, %v832
        %v847 = vpack.c.b16 %v835, %v833
        %v848 = vpack.c.b16 %v838, %v836
        %v849 = vpack.c.b16 %v839, %v837
        %v850 = vpack.c.b16 %v842, %v840
        %v851 = vpack.c.b16 %v843, %v841
        %v861 = vsel %vm425, %v790, 0
        %v864 = vsel %vm425, %v791, 0
        %v867 = vsel %vm425, %v792, 0
        %v870 = vsel %vm425, %v793, 0
        %v873 = vsel %vm425, %v794, 0
        %v876 = vsel %vm425, %v795, 0
        %v879 = vsel %vm425, %v796, 0
        %v882 = vsel %vm425, %v797, 0
        %v885 = vsel %vm425, %v798, 0
        %v888 = vsel %vm425, %v799, 0
        %v891 = vsel %vm425, %v800, 0
        %v894 = vsel %vm425, %v801, 0
        %v897 = vsel %vm425, %v802, 0
        %v900 = vsel %vm425, %v803, 0
        %v903 = vsel %vm425, %v804, 0
        %v906 = vsel %vm425, %v805, 0
        %908 = vmatpush.bf16.msra.mxu0 0
        %909 = vmatpush.bf16.msra.mxu0 0
        %910 = vmatpush.bf16.msra.mxu0 0
        %911 = vmatpush.bf16.msra.mxu0 0
        %912 = vmatpush.bf16.msra.mxu0 %v850
        %913 = vmatpush.bf16.msra.mxu0 %v848
        %914 = vmatpush.bf16.msra.mxu0 %v846
        %915 = vmatpush.bf16.msra.mxu0 %v844
        %916 = vmatmul.bf16.gmra.mxu0 %v861
        %v917 = vpop.f32.mrf.mxu0
        %v918 = vadd.f32 %v816, %v917
        %v919 = vpop.f32.mrf.mxu0
        %v920 = vadd.f32 %v816, %v919
        %921 = vmatmul.bf16.gmra.mxu0 %v864
        %v922 = vpop.f32.mrf.mxu0
        %v923 = vadd.f32 %v816, %v922
        %v924 = vpop.f32.mrf.mxu0
        %v925 = vadd.f32 %v816, %v924
        %926 = vmatmul.bf16.gmra.mxu0 %v867
        %v927 = vpop.f32.mrf.mxu0
        %v928 = vadd.f32 %v816, %v927
        %v929 = vpop.f32.mrf.mxu0
        %v930 = vadd.f32 %v816, %v929
        %931 = vmatmul.bf16.gmra.mxu0 %v870
        %v932 = vpop.f32.mrf.mxu0
        %v933 = vadd.f32 %v816, %v932
        %v934 = vpop.f32.mrf.mxu0
        %v935 = vadd.f32 %v816, %v934
        %936 = vmatmul.bf16.gmra.mxu0 %v873
        %v937 = vpop.f32.mrf.mxu0
        %v938 = vadd.f32 %v816, %v937
        %v939 = vpop.f32.mrf.mxu0
        %v940 = vadd.f32 %v816, %v939
        %941 = vmatmul.bf16.gmra.mxu0 %v876
        %v942 = vpop.f32.mrf.mxu0
        %v943 = vadd.f32 %v816, %v942
        %v944 = vpop.f32.mrf.mxu0
        %v945 = vadd.f32 %v816, %v944
        %946 = vmatmul.bf16.gmra.mxu0 %v879
        %v947 = vpop.f32.mrf.mxu0
        %v948 = vadd.f32 %v816, %v947
        %v949 = vpop.f32.mrf.mxu0
        %v950 = vadd.f32 %v816, %v949
        %951 = vmatmul.bf16.gmra.mxu0 %v882
        %v952 = vpop.f32.mrf.mxu0
        %v953 = vadd.f32 %v816, %v952
        %v954 = vpop.f32.mrf.mxu0
        %v955 = vadd.f32 %v816, %v954
        %956 = vmatmul.bf16.gmra.mxu0 %v885
        %v957 = vpop.f32.mrf.mxu0
        %v958 = vadd.f32 %v816, %v957
        %v959 = vpop.f32.mrf.mxu0
        %v960 = vadd.f32 %v816, %v959
        %961 = vmatmul.bf16.gmra.mxu0 %v888
        %v962 = vpop.f32.mrf.mxu0
        %v963 = vadd.f32 %v816, %v962
        %v964 = vpop.f32.mrf.mxu0
        %v965 = vadd.f32 %v816, %v964
        %966 = vmatmul.bf16.gmra.mxu0 %v891
        %v967 = vpop.f32.mrf.mxu0
        %v968 = vadd.f32 %v816, %v967
        %v969 = vpop.f32.mrf.mxu0
        %v970 = vadd.f32 %v816, %v969
        %971 = vmatmul.bf16.gmra.mxu0 %v894
        %v972 = vpop.f32.mrf.mxu0
        %v973 = vadd.f32 %v816, %v972
        %v974 = vpop.f32.mrf.mxu0
        %v975 = vadd.f32 %v816, %v974
        %976 = vmatmul.bf16.gmra.mxu0 %v897
        %v977 = vpop.f32.mrf.mxu0
        %v978 = vadd.f32 %v816, %v977
        %v979 = vpop.f32.mrf.mxu0
        %v980 = vadd.f32 %v816, %v979
        %981 = vmatmul.bf16.gmra.mxu0 %v900
        %v982 = vpop.f32.mrf.mxu0
        %v983 = vadd.f32 %v816, %v982
        %v984 = vpop.f32.mrf.mxu0
        %v985 = vadd.f32 %v816, %v984
        %986 = vmatmul.bf16.gmra.mxu0 %v903
        %v987 = vpop.f32.mrf.mxu0
        %v988 = vadd.f32 %v816, %v987
        %v989 = vpop.f32.mrf.mxu0
        %v990 = vadd.f32 %v816, %v989
        %991 = vmatmul.bf16.gmra.mxu0 %v906
        %v992 = vpop.f32.mrf.mxu0
        %v993 = vadd.f32 %v816, %v992
        %v994 = vpop.f32.mrf.mxu0
        %v995 = vadd.f32 %v816, %v994
        %996 = vdwg.mxu0
        %997 = vmatpush.bf16.msra.mxu0 0
        %998 = vmatpush.bf16.msra.mxu0 0
        %999 = vmatpush.bf16.msra.mxu0 0
        %1000 = vmatpush.bf16.msra.mxu0 0
        %1001 = vmatpush.bf16.msra.mxu0 %v851
        %1002 = vmatpush.bf16.msra.mxu0 %v849
        %1003 = vmatpush.bf16.msra.mxu0 %v847
        %1004 = vmatpush.bf16.msra.mxu0 %v845
        %1005 = vmatmul.bf16.gmra.mxu0 %v861
        %v1006 = vpop.f32.mrf.mxu0
        %v1007 = vadd.f32 %v817, %v1006
        %v1008 = vpop.f32.mrf.mxu0
        %v1009 = vadd.f32 %v817, %v1008
        %1010 = vmatmul.bf16.gmra.mxu0 %v864
        %v1011 = vpop.f32.mrf.mxu0
        %v1012 = vadd.f32 %v817, %v1011
        %v1013 = vpop.f32.mrf.mxu0
        %v1014 = vadd.f32 %v817, %v1013
        %1015 = vmatmul.bf16.gmra.mxu0 %v867
        %v1016 = vpop.f32.mrf.mxu0
        %v1017 = vadd.f32 %v817, %v1016
        %v1018 = vpop.f32.mrf.mxu0
        %v1019 = vadd.f32 %v817, %v1018
        %1020 = vmatmul.bf16.gmra.mxu0 %v870
        %v1021 = vpop.f32.mrf.mxu0
        %v1022 = vadd.f32 %v817, %v1021
        %v1023 = vpop.f32.mrf.mxu0
        %v1024 = vadd.f32 %v817, %v1023
        %1025 = vmatmul.bf16.gmra.mxu0 %v873
        %v1026 = vpop.f32.mrf.mxu0
        %v1027 = vadd.f32 %v817, %v1026
        %v1028 = vpop.f32.mrf.mxu0
        %v1029 = vadd.f32 %v817, %v1028
        %1030 = vmatmul.bf16.gmra.mxu0 %v876
        %v1031 = vpop.f32.mrf.mxu0
        %v1032 = vadd.f32 %v817, %v1031
        %v1033 = vpop.f32.mrf.mxu0
        %v1034 = vadd.f32 %v817, %v1033
        %1035 = vmatmul.bf16.gmra.mxu0 %v879
        %v1036 = vpop.f32.mrf.mxu0
        %v1037 = vadd.f32 %v817, %v1036
        %v1038 = vpop.f32.mrf.mxu0
        %v1039 = vadd.f32 %v817, %v1038
        %1040 = vmatmul.bf16.gmra.mxu0 %v882
        %v1041 = vpop.f32.mrf.mxu0
        %v1042 = vadd.f32 %v817, %v1041
        %v1043 = vpop.f32.mrf.mxu0
        %v1044 = vadd.f32 %v817, %v1043
        %1045 = vmatmul.bf16.gmra.mxu0 %v885
        %v1046 = vpop.f32.mrf.mxu0
        %v1047 = vadd.f32 %v817, %v1046
        %v1048 = vpop.f32.mrf.mxu0
        %v1049 = vadd.f32 %v817, %v1048
        %1050 = vmatmul.bf16.gmra.mxu0 %v888
        %v1051 = vpop.f32.mrf.mxu0
        %v1052 = vadd.f32 %v817, %v1051
        %v1053 = vpop.f32.mrf.mxu0
        %v1054 = vadd.f32 %v817, %v1053
        %1055 = vmatmul.bf16.gmra.mxu0 %v891
        %v1056 = vpop.f32.mrf.mxu0
        %v1057 = vadd.f32 %v817, %v1056
        %v1058 = vpop.f32.mrf.mxu0
        %v1059 = vadd.f32 %v817, %v1058
        %1060 = vmatmul.bf16.gmra.mxu0 %v894
        %v1061 = vpop.f32.mrf.mxu0
        %v1062 = vadd.f32 %v817, %v1061
        %v1063 = vpop.f32.mrf.mxu0
        %v1064 = vadd.f32 %v817, %v1063
        %1065 = vmatmul.bf16.gmra.mxu0 %v897
        %v1066 = vpop.f32.mrf.mxu0
        %v1067 = vadd.f32 %v817, %v1066
        %v1068 = vpop.f32.mrf.mxu0
        %v1069 = vadd.f32 %v817, %v1068
        %1070 = vmatmul.bf16.gmra.mxu0 %v900
        %v1071 = vpop.f32.mrf.mxu0
        %v1072 = vadd.f32 %v817, %v1071
        %v1073 = vpop.f32.mrf.mxu0
        %v1074 = vadd.f32 %v817, %v1073
        %1075 = vmatmul.bf16.gmra.mxu0 %v903
        %v1076 = vpop.f32.mrf.mxu0
        %v1077 = vadd.f32 %v817, %v1076
        %v1078 = vpop.f32.mrf.mxu0
        %v1079 = vadd.f32 %v817, %v1078
        %1080 = vmatmul.bf16.gmra.mxu0 %v906
        %v1081 = vpop.f32.mrf.mxu0
        %v1082 = vadd.f32 %v817, %v1081
        %v1083 = vpop.f32.mrf.mxu0
        %v1084 = vadd.f32 %v817, %v1083
        %1085 = vdwg.mxu0
        %v1086 = vpack.c.bf16 %v918, %v918
        %v1087 = vpack.c.bf16 %v920, %v920
        %v1088 = vpack.c.bf16 %v923, %v923
        %v1089 = vpack.c.bf16 %v925, %v925
        %v1090 = vpack.c.bf16 %v928, %v928
        %v1091 = vpack.c.bf16 %v930, %v930
        %v1092 = vpack.c.bf16 %v933, %v933
        %v1093 = vpack.c.bf16 %v935, %v935
        %v1094 = vpack.c.bf16 %v938, %v938
        %v1095 = vpack.c.bf16 %v940, %v940
        %v1096 = vpack.c.bf16 %v943, %v943
        %v1097 = vpack.c.bf16 %v945, %v945
        %v1098 = vpack.c.bf16 %v948, %v948
        %v1099 = vpack.c.bf16 %v950, %v950
        %v1100 = vpack.c.bf16 %v953, %v953
        %v1101 = vpack.c.bf16 %v955, %v955
        %v1102 = vpack.c.bf16 %v958, %v958
        %v1103 = vpack.c.bf16 %v960, %v960
        %v1104 = vpack.c.bf16 %v963, %v963
        %v1105 = vpack.c.bf16 %v965, %v965
        %v1106 = vpack.c.bf16 %v968, %v968
        %v1107 = vpack.c.bf16 %v970, %v970
        %v1108 = vpack.c.bf16 %v973, %v973
        %v1109 = vpack.c.bf16 %v975, %v975
        %v1110 = vpack.c.bf16 %v978, %v978
        %v1111 = vpack.c.bf16 %v980, %v980
        %v1112 = vpack.c.bf16 %v983, %v983
        %v1113 = vpack.c.bf16 %v985, %v985
        %v1114 = vpack.c.bf16 %v988, %v988
        %v1115 = vpack.c.bf16 %v990, %v990
        %v1116 = vpack.c.bf16 %v993, %v993
        %v1117 = vpack.c.bf16 %v995, %v995
        %vm1118 = vcmask 519168
        %1119 = vst.msk [vmem:[%s381] sm:$0xf] %vm1118, %v1086
        %1120 = vst.msk [vmem:[%s381 + $0x4] sm:$0xf] %vm1118, %v1087
        %1121 = vst.msk [vmem:[%s381 + $0x8] sm:$0xf] %vm1118, %v1088
        %1122 = vst.msk [vmem:[%s381 + $0xc] sm:$0xf] %vm1118, %v1089
        %1123 = vst.msk [vmem:[%s381 + $0x10] sm:$0xf] %vm1118, %v1090
        %1124 = vst.msk [vmem:[%s381 + $0x14] sm:$0xf] %vm1118, %v1091
        %1125 = vst.msk [vmem:[%s381 + $0x18] sm:$0xf] %vm1118, %v1092
        %1126 = vst.msk [vmem:[%s381 + $0x1c] sm:$0xf] %vm1118, %v1093
        %1127 = vst.msk [vmem:[%s381 + $0x20] sm:$0xf] %vm1118, %v1094
        %1128 = vst.msk [vmem:[%s381 + $0x24] sm:$0xf] %vm1118, %v1095
        %1129 = vst.msk [vmem:[%s381 + $0x28] sm:$0xf] %vm1118, %v1096
        %1130 = vst.msk [vmem:[%s381 + $0x2c] sm:$0xf] %vm1118, %v1097
        %1131 = vst.msk [vmem:[%s381 + $0x30] sm:$0xf] %vm1118, %v1098
        %1132 = vst.msk [vmem:[%s381 + $0x34] sm:$0xf] %vm1118, %v1099
        %1133 = vst.msk [vmem:[%s381 + $0x38] sm:$0xf] %vm1118, %v1100
        %1134 = vst.msk [vmem:[%s381 + $0x3c] sm:$0xf] %vm1118, %v1101
        %1135 = vst.msk [vmem:[%s381 + $0x40] sm:$0xf] %vm1118, %v1102
        %1136 = vst.msk [vmem:[%s381 + $0x44] sm:$0xf] %vm1118, %v1103
        %1137 = vst.msk [vmem:[%s381 + $0x48] sm:$0xf] %vm1118, %v1104
        %1138 = vst.msk [vmem:[%s381 + $0x4c] sm:$0xf] %vm1118, %v1105
        %1139 = vst.msk [vmem:[%s381 + $0x50] sm:$0xf] %vm1118, %v1106
        %1140 = vst.msk [vmem:[%s381 + $0x54] sm:$0xf] %vm1118, %v1107
        %1141 = vst.msk [vmem:[%s381 + $0x58] sm:$0xf] %vm1118, %v1108
        %1142 = vst.msk [vmem:[%s381 + $0x5c] sm:$0xf] %vm1118, %v1109
        %1143 = vst.msk [vmem:[%s381 + $0x60] sm:$0xf] %vm1118, %v1110
        %1144 = vst.msk [vmem:[%s381 + $0x64] sm:$0xf] %vm1118, %v1111
        %1145 = vst.msk [vmem:[%s381 + $0x68] sm:$0xf] %vm1118, %v1112
        %1146 = vst.msk [vmem:[%s381 + $0x6c] sm:$0xf] %vm1118, %v1113
        %1147 = vst.msk [vmem:[%s381 + $0x70] sm:$0xf] %vm1118, %v1114
        %1148 = vst.msk [vmem:[%s381 + $0x74] sm:$0xf] %vm1118, %v1115
        %1149 = vst.msk [vmem:[%s381 + $0x78] sm:$0xf] %vm1118, %v1116
        %1150 = vst.msk [vmem:[%s381 + $0x7c] sm:$0xf] %vm1118, %v1117
        %1183 = vrot.lane.b32.xlu0 %v1086, 64
        %v1184 = vpop.permute.xlu0 %1183
        %1185 = vrot.lane.b32.xlu0 %v1087, 64
        %v1186 = vpop.permute.xlu0 %1185
        %1187 = vrot.lane.b32.xlu0 %v1088, 64
        %v1188 = vpop.permute.xlu0 %1187
        %1189 = vrot.lane.b32.xlu0 %v1089, 64
        %v1190 = vpop.permute.xlu0 %1189
        %1191 = vrot.lane.b32.xlu0 %v1090, 64
        %v1192 = vpop.permute.xlu0 %1191
        %1193 = vrot.lane.b32.xlu0 %v1091, 64
        %v1194 = vpop.permute.xlu0 %1193
        %1195 = vrot.lane.b32.xlu0 %v1092, 64
        %v1196 = vpop.permute.xlu0 %1195
        %1197 = vrot.lane.b32.xlu0 %v1093, 64
        %v1198 = vpop.permute.xlu0 %1197
        %1199 = vrot.lane.b32.xlu0 %v1094, 64
        %v1200 = vpop.permute.xlu0 %1199
        %1201 = vrot.lane.b32.xlu0 %v1095, 64
        %v1202 = vpop.permute.xlu0 %1201
        %1203 = vrot.lane.b32.xlu0 %v1096, 64
        %v1204 = vpop.permute.xlu0 %1203
        %1205 = vrot.lane.b32.xlu0 %v1097, 64
        %v1206 = vpop.permute.xlu0 %1205
        %1207 = vrot.lane.b32.xlu0 %v1098, 64
        %v1208 = vpop.permute.xlu0 %1207
        %1209 = vrot.lane.b32.xlu0 %v1099, 64
        %v1210 = vpop.permute.xlu0 %1209
        %1211 = vrot.lane.b32.xlu0 %v1100, 64
        %v1212 = vpop.permute.xlu0 %1211
        %1213 = vrot.lane.b32.xlu0 %v1101, 64
        %v1214 = vpop.permute.xlu0 %1213
        %1215 = vrot.lane.b32.xlu0 %v1102, 64
        %v1216 = vpop.permute.xlu0 %1215
        %1217 = vrot.lane.b32.xlu0 %v1103, 64
        %v1218 = vpop.permute.xlu0 %1217
        %1219 = vrot.lane.b32.xlu0 %v1104, 64
        %v1220 = vpop.permute.xlu0 %1219
        %1221 = vrot.lane.b32.xlu0 %v1105, 64
        %v1222 = vpop.permute.xlu0 %1221
        %1223 = vrot.lane.b32.xlu0 %v1106, 64
        %v1224 = vpop.permute.xlu0 %1223
        %1225 = vrot.lane.b32.xlu0 %v1107, 64
        %v1226 = vpop.permute.xlu0 %1225
        %1227 = vrot.lane.b32.xlu0 %v1108, 64
        %v1228 = vpop.permute.xlu0 %1227
        %1229 = vrot.lane.b32.xlu0 %v1109, 64
        %v1230 = vpop.permute.xlu0 %1229
        %1231 = vrot.lane.b32.xlu0 %v1110, 64
        %v1232 = vpop.permute.xlu0 %1231
        %1233 = vrot.lane.b32.xlu0 %v1111, 64
        %v1234 = vpop.permute.xlu0 %1233
        %1235 = vrot.lane.b32.xlu0 %v1112, 64
        %v1236 = vpop.permute.xlu0 %1235
        %1237 = vrot.lane.b32.xlu0 %v1113, 64
        %v1238 = vpop.permute.xlu0 %1237
        %1239 = vrot.lane.b32.xlu0 %v1114, 64
        %v1240 = vpop.permute.xlu0 %1239
        %1241 = vrot.lane.b32.xlu0 %v1115, 64
        %v1242 = vpop.permute.xlu0 %1241
        %1243 = vrot.lane.b32.xlu0 %v1116, 64
        %v1244 = vpop.permute.xlu0 %1243
        %1245 = vrot.lane.b32.xlu0 %v1117, 64
        %v1246 = vpop.permute.xlu0 %1245
        %1279 = vst.msk [vmem:[%s386] sm:$0xf] %vm1118, %v1184
        %1280 = vst.msk [vmem:[%s386 + $0x4] sm:$0xf] %vm1118, %v1186
        %1281 = vst.msk [vmem:[%s386 + $0x8] sm:$0xf] %vm1118, %v1188
        %1282 = vst.msk [vmem:[%s386 + $0xc] sm:$0xf] %vm1118, %v1190
        %1283 = vst.msk [vmem:[%s386 + $0x10] sm:$0xf] %vm1118, %v1192
        %1284 = vst.msk [vmem:[%s386 + $0x14] sm:$0xf] %vm1118, %v1194
        %1285 = vst.msk [vmem:[%s386 + $0x18] sm:$0xf] %vm1118, %v1196
        %1286 = vst.msk [vmem:[%s386 + $0x1c] sm:$0xf] %vm1118, %v1198
        %1287 = vst.msk [vmem:[%s386 + $0x20] sm:$0xf] %vm1118, %v1200
        %1288 = vst.msk [vmem:[%s386 + $0x24] sm:$0xf] %vm1118, %v1202
        %1289 = vst.msk [vmem:[%s386 + $0x28] sm:$0xf] %vm1118, %v1204
        %1290 = vst.msk [vmem:[%s386 + $0x2c] sm:$0xf] %vm1118, %v1206
        %1291 = vst.msk [vmem:[%s386 + $0x30] sm:$0xf] %vm1118, %v1208
        %1292 = vst.msk [vmem:[%s386 + $0x34] sm:$0xf] %vm1118, %v1210
        %1293 = vst.msk [vmem:[%s386 + $0x38] sm:$0xf] %vm1118, %v1212
        %1294 = vst.msk [vmem:[%s386 + $0x3c] sm:$0xf] %vm1118, %v1214
        %1295 = vst.msk [vmem:[%s386 + $0x40] sm:$0xf] %vm1118, %v1216
        %1296 = vst.msk [vmem:[%s386 + $0x44] sm:$0xf] %vm1118, %v1218
        %1297 = vst.msk [vmem:[%s386 + $0x48] sm:$0xf] %vm1118, %v1220
        %1298 = vst.msk [vmem:[%s386 + $0x4c] sm:$0xf] %vm1118, %v1222
        %1299 = vst.msk [vmem:[%s386 + $0x50] sm:$0xf] %vm1118, %v1224
        %1300 = vst.msk [vmem:[%s386 + $0x54] sm:$0xf] %vm1118, %v1226
        %1301 = vst.msk [vmem:[%s386 + $0x58] sm:$0xf] %vm1118, %v1228
        %1302 = vst.msk [vmem:[%s386 + $0x5c] sm:$0xf] %vm1118, %v1230
        %1303 = vst.msk [vmem:[%s386 + $0x60] sm:$0xf] %vm1118, %v1232
        %1304 = vst.msk [vmem:[%s386 + $0x64] sm:$0xf] %vm1118, %v1234
        %1305 = vst.msk [vmem:[%s386 + $0x68] sm:$0xf] %vm1118, %v1236
        %1306 = vst.msk [vmem:[%s386 + $0x6c] sm:$0xf] %vm1118, %v1238
        %1307 = vst.msk [vmem:[%s386 + $0x70] sm:$0xf] %vm1118, %v1240
        %1308 = vst.msk [vmem:[%s386 + $0x74] sm:$0xf] %vm1118, %v1242
        %1309 = vst.msk [vmem:[%s386 + $0x78] sm:$0xf] %vm1118, %v1244
        %1310 = vst.msk [vmem:[%s386 + $0x7c] sm:$0xf] %vm1118, %v1246
        %v1311 = vpack.c.bf16 %v1007, %v1007
        %v1312 = vpack.c.bf16 %v1009, %v1009
        %v1313 = vpack.c.bf16 %v1012, %v1012
        %v1314 = vpack.c.bf16 %v1014, %v1014
        %v1315 = vpack.c.bf16 %v1017, %v1017
        %v1316 = vpack.c.bf16 %v1019, %v1019
        %v1317 = vpack.c.bf16 %v1022, %v1022
        %v1318 = vpack.c.bf16 %v1024, %v1024
        %v1319 = vpack.c.bf16 %v1027, %v1027
        %v1320 = vpack.c.bf16 %v1029, %v1029
        %v1321 = vpack.c.bf16 %v1032, %v1032
        %v1322 = vpack.c.bf16 %v1034, %v1034
        %v1323 = vpack.c.bf16 %v1037, %v1037
        %v1324 = vpack.c.bf16 %v1039, %v1039
        %v1325 = vpack.c.bf16 %v1042, %v1042
        %v1326 = vpack.c.bf16 %v1044, %v1044
        %v1327 = vpack.c.bf16 %v1047, %v1047
        %v1328 = vpack.c.bf16 %v1049, %v1049
        %v1329 = vpack.c.bf16 %v1052, %v1052
        %v1330 = vpack.c.bf16 %v1054, %v1054
        %v1331 = vpack.c.bf16 %v1057, %v1057
        %v1332 = vpack.c.bf16 %v1059, %v1059
        %v1333 = vpack.c.bf16 %v1062, %v1062
        %v1334 = vpack.c.bf16 %v1064, %v1064
        %v1335 = vpack.c.bf16 %v1067, %v1067
        %v1336 = vpack.c.bf16 %v1069, %v1069
        %v1337 = vpack.c.bf16 %v1072, %v1072
        %v1338 = vpack.c.bf16 %v1074, %v1074
        %v1339 = vpack.c.bf16 %v1077, %v1077
        %v1340 = vpack.c.bf16 %v1079, %v1079
        %v1341 = vpack.c.bf16 %v1082, %v1082
        %v1342 = vpack.c.bf16 %v1084, %v1084
        %1343 = vst.msk [vmem:[%s391] sm:$0xf] %vm1118, %v1311
        %1344 = vst.msk [vmem:[%s391 + $0x4] sm:$0xf] %vm1118, %v1312
        %1345 = vst.msk [vmem:[%s391 + $0x8] sm:$0xf] %vm1118, %v1313
        %1346 = vst.msk [vmem:[%s391 + $0xc] sm:$0xf] %vm1118, %v1314
        %1347 = vst.msk [vmem:[%s391 + $0x10] sm:$0xf] %vm1118, %v1315
        %1348 = vst.msk [vmem:[%s391 + $0x14] sm:$0xf] %vm1118, %v1316
        %1349 = vst.msk [vmem:[%s391 + $0x18] sm:$0xf] %vm1118, %v1317
        %1350 = vst.msk [vmem:[%s391 + $0x1c] sm:$0xf] %vm1118, %v1318
        %1351 = vst.msk [vmem:[%s391 + $0x20] sm:$0xf] %vm1118, %v1319
        %1352 = vst.msk [vmem:[%s391 + $0x24] sm:$0xf] %vm1118, %v1320
        %1353 = vst.msk [vmem:[%s391 + $0x28] sm:$0xf] %vm1118, %v1321
        %1354 = vst.msk [vmem:[%s391 + $0x2c] sm:$0xf] %vm1118, %v1322
        %1355 = vst.msk [vmem:[%s391 + $0x30] sm:$0xf] %vm1118, %v1323
        %1356 = vst.msk [vmem:[%s391 + $0x34] sm:$0xf] %vm1118, %v1324
        %1357 = vst.msk [vmem:[%s391 + $0x38] sm:$0xf] %vm1118, %v1325
        %1358 = vst.msk [vmem:[%s391 + $0x3c] sm:$0xf] %vm1118, %v1326
        %1359 = vst.msk [vmem:[%s391 + $0x40] sm:$0xf] %vm1118, %v1327
        %1360 = vst.msk [vmem:[%s391 + $0x44] sm:$0xf] %vm1118, %v1328
        %1361 = vst.msk [vmem:[%s391 + $0x48] sm:$0xf] %vm1118, %v1329
        %1362 = vst.msk [vmem:[%s391 + $0x4c] sm:$0xf] %vm1118, %v1330
        %1363 = vst.msk [vmem:[%s391 + $0x50] sm:$0xf] %vm1118, %v1331
        %1364 = vst.msk [vmem:[%s391 + $0x54] sm:$0xf] %vm1118, %v1332
        %1365 = vst.msk [vmem:[%s391 + $0x58] sm:$0xf] %vm1118, %v1333
        %1366 = vst.msk [vmem:[%s391 + $0x5c] sm:$0xf] %vm1118, %v1334
        %1367 = vst.msk [vmem:[%s391 + $0x60] sm:$0xf] %vm1118, %v1335
        %1368 = vst.msk [vmem:[%s391 + $0x64] sm:$0xf] %vm1118, %v1336
        %1369 = vst.msk [vmem:[%s391 + $0x68] sm:$0xf] %vm1118, %v1337
        %1370 = vst.msk [vmem:[%s391 + $0x6c] sm:$0xf] %vm1118, %v1338
        %1371 = vst.msk [vmem:[%s391 + $0x70] sm:$0xf] %vm1118, %v1339
        %1372 = vst.msk [vmem:[%s391 + $0x74] sm:$0xf] %vm1118, %v1340
        %1373 = vst.msk [vmem:[%s391 + $0x78] sm:$0xf] %vm1118, %v1341
        %1374 = vst.msk [vmem:[%s391 + $0x7c] sm:$0xf] %vm1118, %v1342
        %p1375 = scmp.lt.s32.totalorder %s23, 1
        %s1376 = scalar_select %p1375, %s23, 1
        %s1377 = smul.addr %s1376, 32
        %s1378 = smul.addr %s1377, 4
        %s1379 = scalar_lea.vmem %s7, %s1378
        %p1380 = scmp.lt.s32.totalorder %s23, 1
        %s1381 = scalar_select %p1380, %s23, 1
        %s1382 = smul.addr %s1381, 32
        %s1383 = smul.addr %s1382, 4
        %s1384 = scalar_lea.vmem %s8, %s1383
        %p1385 = scmp.lt.s32.totalorder %s23, 1
        %s1386 = scalar_select %p1385, %s23, 1
        %s1387 = smul.addr %s1386, 32
        %s1388 = smul.addr %s1387, 4
        %s1389 = scalar_lea.vmem %s9, %s1388
        // Predicated region
        $region57: #{attn_block.2} parent=47 // pred_check
          %p1390 = pneg %p193
        $region58: #{attn_block.2} parent=47 // pred_check_branch
          %1392 = sbr.rel (%p1390) target = $region60
        $region59: #{attn_block.2} parent=47 // pred_region
          _
        $region60: #{attn_block.2} parent=47 // pred_fallthru
          _
        // Predicated region
        $region61: #{attn_block.2} parent=47 // pred_check
          %p1393 = pneg %p219
        $region62: #{attn_block.2} parent=47 // pred_check_branch
          %1395 = sbr.rel (%p1393) target = $region64
        $region63: #{attn_block.2} parent=47 // pred_region
          _
        $region64: #{attn_block.2} parent=47 // pred_fallthru
          _
        // Predicated region
        $region65: #{attn_block.2} parent=47 // pred_check
          %p1396 = pneg %p245
        $region66: #{attn_block.2} parent=47 // pred_check_branch
          %1398 = sbr.rel (%p1396) target = $region68
        $region67: #{attn_block.2} parent=47 // pred_region
          _
        $region68: #{attn_block.2} parent=47 // pred_fallthru
          _
      $region48: #{attn_block.2} parent=5 // pred_fallthru
        _
      %p1399 = scmp.le.s32.totalorder 2, %s18
      // Predicated region
      $region69: #{attn_block.2} parent=5 // pred_check
        %p1400 = pneg %p1399
      $region70: #{attn_block.2} parent=5 // pred_check_branch
        %1402 = sbr.rel (%p1400) target = $region72
      $region71: #{attn_block.2} parent=5 // pred_region
        %s1403 = ssub.s32 %s18, 2
        // Predicated region
        $region73: #{attn_block.2} parent=71 // pred_check
          %p1404 = pneg %p199
        $region74: #{attn_block.2} parent=71 // pred_check_branch
          %1406 = sbr.rel (%p1404) target = $region76
        $region75: #{attn_block.2} parent=71 // pred_region
          %p1407 = scmp.lt.s32.totalorder %s24, 1
          %s1408 = scalar_select %p1407, %s24, 1
          %s1409 = smul.addr %s1408, 32
          %s1410 = smul.addr %s1409, 4
          %s1411 = scalar_lea.vmem %s7, %s1410
        $region76: #{attn_block.2} parent=71 // pred_fallthru
          _
        // Predicated region
        $region77: #{attn_block.2} parent=71 // pred_check
          %p1412 = pneg %p225
        $region78: #{attn_block.2} parent=71 // pred_check_branch
          %1414 = sbr.rel (%p1412) target = $region80
        $region79: #{attn_block.2} parent=71 // pred_region
          %p1415 = scmp.lt.s32.totalorder %s24, 1
          %s1416 = scalar_select %p1415, %s24, 1
          %s1417 = smul.addr %s1416, 32
          %s1418 = smul.addr %s1417, 4
          %s1419 = scalar_lea.vmem %s8, %s1418
        $region80: #{attn_block.2} parent=71 // pred_fallthru
          _
        // Predicated region
        $region81: #{attn_block.2} parent=71 // pred_check
          %p1420 = pneg %p251
        $region82: #{attn_block.2} parent=71 // pred_check_branch
          %1422 = sbr.rel (%p1420) target = $region84
        $region83: #{attn_block.2} parent=71 // pred_region
          %p1423 = scmp.lt.s32.totalorder %s24, 1
          %s1424 = scalar_select %p1423, %s24, 1
          %s1425 = smul.addr %s1424, 32
          %s1426 = smul.addr %s1425, 4
          %s1427 = scalar_lea.vmem %s9, %s1426
        $region84: #{attn_block.2} parent=71 // pred_fallthru
          _
      $region72: #{attn_block.2} parent=5 // pred_fallthru
        _
    $region6: #{attn_block.2} parent=1 // loop_footer
      %s22 = sadd.s32 1, %s18
    $region7: #{attn_block.2} parent=1 // loop_footer_branch
      %17 = sbr.rel target = $region3
    $region8: #{attn_block.2} parent=1 // loop_exit
      _
    %1428 = vsyncpa [#allocation3], 1
    %s1429 = scalar_lea.sflag [#allocation3], 1
    %1430 = vsyncpa %s1429, 1
    %1431 = vsyncpa [#allocation5], 1

</llo_original>
